<compile_context>
chip_gen: v6e
topology: v6e:2x2x1
jax: 0.10.0
libtpu: 0.0.40
codegen_flags: <defaults>
</compile_context>

<pallas_src>
import jax
import jax.numpy as jnp
from jax.experimental import pallas as pl
from jax.experimental.pallas import tpu as pltpu

LATENT_DIMS = 2
IN_DIM = 28 * 28          # 784
IN_PAD = 896              # 7 * 128, lane-dense feature dim
HIDDEN = 128
TB = 128                  # batch tile (rows per grid step)


def autoencoder_kernel(x_ref,          # (TB, IN_PAD)   bf16
                       w1_ref, b1_ref,  # (IN_PAD, 128) bf16 / (1, 128) f32
                       w23_ref, b23_ref,  # (128, 128) bf16 / (1, 128) f32  (fused enc2 @ dec0)
                       w4_ref, b4_ref,  # (128, IN_PAD) bf16 / (1, IN_PAD) f32
                       out_ref):        # (TB, IN_PAD)   f32
    x = x_ref[...]

    # encoder Linear(784->128) + ReLU   (bf16 operands, f32 accumulate)
    h1 = jnp.dot(x, w1_ref[...], preferred_element_type=jnp.float32) + b1_ref[...]
    h1 = jnp.maximum(h1, 0.0)

    # fused latent path: Linear(128->2) ; Linear(2->128), then decoder ReLU
    h2 = jnp.dot(h1.astype(jnp.bfloat16), w23_ref[...],
                 preferred_element_type=jnp.float32) + b23_ref[...]
    h2 = jnp.maximum(h2, 0.0)

    # decoder Linear(128->784) + Sigmoid
    logits = jnp.dot(h2.astype(jnp.bfloat16), w4_ref[...],
                     preferred_element_type=jnp.float32) + b4_ref[...]
    out_ref[...] = jax.nn.sigmoid(logits).astype(out_ref.dtype)


def autoencoder_forward(x, params, *, tb=TB):
    """x: (B, 784) float32 -> (B, 784) float32 reconstruction."""
    (w1, b1), (w2, b2), (w3, b3), (w4, b4) = params
    B = x.shape[0]

    # ---- host-side fusion of the latent matmuls (exact: no nonlinearity on z) ----
    w23 = w2 @ w3                      # (128, 128) f32
    b23 = b2 @ w3 + b3                 # (1, 128)   f32

    # ---- zero-pad feature dim 784 -> 896 (exact: padded rows/cols are zero) ----
    pad_f = IN_PAD - IN_DIM
    x_p = jnp.pad(x, ((0, 0), (0, pad_f)))
    w1_p = jnp.pad(w1, ((0, pad_f), (0, 0)))
    w4_p = jnp.pad(w4, ((0, 0), (0, pad_f)))
    b4_p = jnp.pad(b4, ((0, 0), (0, pad_f)))

    # ---- zero-pad batch to a multiple of the batch tile ----
    b_pad = pl.cdiv(B, tb) * tb
    x_p = jnp.pad(x_p, ((0, b_pad - B), (0, 0)))

    # ---- bf16 matmul operands, f32 biases / accumulation ----
    x_bf = x_p.astype(jnp.bfloat16)
    w1_bf = w1_p.astype(jnp.bfloat16)
    w23_bf = w23.astype(jnp.bfloat16)
    w4_bf = w4_p.astype(jnp.bfloat16)

    grid = (b_pad // tb,)
    batch_tiled = lambda i: (i, 0)     # x / out move with the batch grid axis
    resident = lambda i: (0, 0)        # weights/biases stay put across steps

    out = pl.pallas_call(
        autoencoder_kernel,
        out_shape=jax.ShapeDtypeStruct((b_pad, IN_PAD), jnp.float32),
        grid=grid,
        in_specs=[
            pl.BlockSpec((tb, IN_PAD), batch_tiled),        # x
            pl.BlockSpec((IN_PAD, HIDDEN), resident),       # w1
            pl.BlockSpec((1, HIDDEN), resident),            # b1
            pl.BlockSpec((HIDDEN, HIDDEN), resident),       # w23
            pl.BlockSpec((1, HIDDEN), resident),            # b23
            pl.BlockSpec((HIDDEN, IN_PAD), resident),       # w4
            pl.BlockSpec((1, IN_PAD), resident),            # b4
        ],
        out_specs=pl.BlockSpec((tb, IN_PAD), batch_tiled),
        compiler_params=pltpu.CompilerParams(
            dimension_semantics=("parallel",)),             # shard batch across TCs (v7x)
    )(x_bf, w1_bf, b1, w23_bf, b23, w4_bf, b4_p)

    return out[:B, :IN_DIM]


def init_linear(key, in_f, out_f):
    """Deterministic init mimicking PyTorch's default Linear init.
    Returns W as (in_f, out_f) (pre-transposed) and b as (1, out_f)."""
    kw, kb = jax.random.split(key)
    bound = 1.0 / jnp.sqrt(jnp.float32(in_f))
    w = jax.random.uniform(kw, (in_f, out_f), jnp.float32, -bound, bound)
    b = jax.random.uniform(kb, (1, out_f), jnp.float32, -bound, bound)
    return w, b


def reference_forward_f32(x, params):
    """Original, unfused, full-f32 forward (matches PyTorch semantics)."""
    (w1, b1), (w2, b2), (w3, b3), (w4, b4) = params
    h1 = jnp.maximum(x @ w1 + b1, 0.0)
    z = h1 @ w2 + b2
    h2 = jnp.maximum(z @ w3 + b3, 0.0)
    return jax.nn.sigmoid(h2 @ w4 + b4)


def reference_forward_bf16_fused(x, params):
    """Pure-JAX mirror of the kernel's math (fused latent, bf16 operands, f32 acc)."""
    (w1, b1), (w2, b2), (w3, b3), (w4, b4) = params
    w23 = w2 @ w3
    b23 = b2 @ w3 + b3
    bf = jnp.bfloat16
    h1 = jnp.maximum(
        jnp.dot(x.astype(bf), w1.astype(bf), preferred_element_type=jnp.float32) + b1, 0.0)
    h2 = jnp.maximum(
        jnp.dot(h1.astype(bf), w23.astype(bf), preferred_element_type=jnp.float32) + b23, 0.0)
    logits = jnp.dot(h2.astype(bf), w4.astype(bf), preferred_element_type=jnp.float32) + b4
    return jax.nn.sigmoid(logits)


if __name__ == "__main__":
    key = jax.random.PRNGKey(0)
    k_x, k1, k2, k3, k4 = jax.random.split(key, 5)

    B = 8
    x = jax.random.uniform(k_x, (B, IN_DIM), jnp.float32)  # MNIST-like pixels in [0,1)

    params = (
        init_linear(k1, IN_DIM, HIDDEN),        # encoder layer 0
        init_linear(k2, HIDDEN, LATENT_DIMS),   # encoder layer 2
        init_linear(k3, LATENT_DIMS, HIDDEN),   # decoder layer 0
        init_linear(k4, HIDDEN, IN_DIM),        # decoder layer 2
    )

    out = autoencoder_forward(x, params)
    out = jax.block_until_ready(out)
    assert out.shape == (B, IN_DIM)

    # Tight check vs. a pure-JAX mirror of the kernel's math (bf16 operands, fused latent).
    ref_bf16 = reference_forward_bf16_fused(x, params)
    assert jnp.allclose(out, ref_bf16, atol=2e-3, rtol=2e-3), \
        "Pallas output mismatch vs bf16-fused JAX reference"

    # Looser check vs. the original full-f32 PyTorch-equivalent forward
    # (difference is only bf16 operand rounding in the matmuls).
    ref_f32 = reference_forward_f32(x, params)
    assert jnp.allclose(out, ref_f32, atol=3e-2, rtol=3e-2), \
        "Pallas output mismatch vs f32 reference"

    print("KERNEL_OK")
</pallas_src>

<mosaic_0001>
module attributes {stable_mosaic.version = 11 : i64} {
  func.func @autoencoder_kernel(%arg0: i32, %arg1: memref<128x896xbf16, #tpu.memory_space<vmem>>, %arg2: memref<896x128xbf16, #tpu.memory_space<vmem>>, %arg3: memref<1x128xf32, #tpu.memory_space<vmem>>, %arg4: memref<128x128xbf16, #tpu.memory_space<vmem>>, %arg5: memref<1x128xf32, #tpu.memory_space<vmem>>, %arg6: memref<128x896xbf16, #tpu.memory_space<vmem>>, %arg7: memref<1x896xf32, #tpu.memory_space<vmem>>, %arg8: memref<128x896xf32, #tpu.memory_space<vmem>>) attributes {dimension_semantics = [#tpu.dimension_semantics<parallel>], iteration_bounds = array<i64: 1>, scalar_prefetch = 0 : i64, scratch_operands = 0 : i64, tpu.core_type = #tpu.core_type<tc>, window_params = [{transform_indices = @transform_0, window_bounds = array<i64: 128, 896>}, {pipeline_mode = #tpu.pipeline_mode<synchronous>, transform_indices = @transform_1, window_bounds = array<i64: 896, 128>}, {pipeline_mode = #tpu.pipeline_mode<synchronous>, transform_indices = @transform_2, window_bounds = array<i64: 1, 128>}, {pipeline_mode = #tpu.pipeline_mode<synchronous>, transform_indices = @transform_3, window_bounds = array<i64: 128, 128>}, {pipeline_mode = #tpu.pipeline_mode<synchronous>, transform_indices = @transform_4, window_bounds = array<i64: 1, 128>}, {pipeline_mode = #tpu.pipeline_mode<synchronous>, transform_indices = @transform_5, window_bounds = array<i64: 128, 896>}, {pipeline_mode = #tpu.pipeline_mode<synchronous>, transform_indices = @transform_6, window_bounds = array<i64: 1, 896>}, {transform_indices = @transform_7, window_bounds = array<i64: 128, 896>}]} {
    %c0 = arith.constant 0 : index
    %c0_0 = arith.constant 0 : index
    %0 = vector.load %arg1[%c0, %c0_0] : memref<128x896xbf16, #tpu.memory_space<vmem>>, vector<128x896xbf16>
    %c0_1 = arith.constant 0 : index
    %c0_2 = arith.constant 0 : index
    %1 = vector.load %arg2[%c0_1, %c0_2] : memref<896x128xbf16, #tpu.memory_space<vmem>>, vector<896x128xbf16>
    %cst = arith.constant dense<0.000000e+00> : vector<128x128xf32>
    %2 = tpu.matmul %0, %1, %cst {dimension_numbers = #tpu.dot_dimension_numbers<[1], [0], [0], [1], [0, 0, 1, 1], [], []>} : vector<128x896xbf16>, vector<896x128xbf16>, vector<128x128xf32> -> vector<128x128xf32>
    %c0_3 = arith.constant 0 : index
    %c0_4 = arith.constant 0 : index
    %3 = vector.load %arg3[%c0_3, %c0_4] : memref<1x128xf32, #tpu.memory_space<vmem>>, vector<1x128xf32>
    %4 = vector.broadcast %3 : vector<1x128xf32> to vector<128x128xf32>
    %5 = arith.addf %2, %4 : vector<128x128xf32>
    %cst_5 = arith.constant 0.000000e+00 : f32
    %6 = vector.broadcast %cst_5 : f32 to vector<128x128xf32>
    %7 = arith.maximumf %5, %6 : vector<128x128xf32>
    %8 = arith.truncf %7 : vector<128x128xf32> to vector<128x128xbf16>
    %c0_6 = arith.constant 0 : index
    %c0_7 = arith.constant 0 : index
    %9 = vector.load %arg4[%c0_6, %c0_7] : memref<128x128xbf16, #tpu.memory_space<vmem>>, vector<128x128xbf16>
    %cst_8 = arith.constant dense<0.000000e+00> : vector<128x128xf32>
    %10 = tpu.matmul %8, %9, %cst_8 {dimension_numbers = #tpu.dot_dimension_numbers<[1], [0], [0], [1], [0, 0, 1, 1], [], []>} : vector<128x128xbf16>, vector<128x128xbf16>, vector<128x128xf32> -> vector<128x128xf32>
    %c0_9 = arith.constant 0 : index
    %c0_10 = arith.constant 0 : index
    %11 = vector.load %arg5[%c0_9, %c0_10] : memref<1x128xf32, #tpu.memory_space<vmem>>, vector<1x128xf32>
    %12 = vector.broadcast %11 : vector<1x128xf32> to vector<128x128xf32>
    %13 = arith.addf %10, %12 : vector<128x128xf32>
    %cst_11 = arith.constant 0.000000e+00 : f32
    %14 = vector.broadcast %cst_11 : f32 to vector<128x128xf32>
    %15 = arith.maximumf %13, %14 : vector<128x128xf32>
    %16 = arith.truncf %15 : vector<128x128xf32> to vector<128x128xbf16>
    %c0_12 = arith.constant 0 : index
    %c0_13 = arith.constant 0 : index
    %17 = vector.load %arg6[%c0_12, %c0_13] : memref<128x896xbf16, #tpu.memory_space<vmem>>, vector<128x896xbf16>
    %cst_14 = arith.constant dense<0.000000e+00> : vector<128x896xf32>
    %18 = tpu.matmul %16, %17, %cst_14 {dimension_numbers = #tpu.dot_dimension_numbers<[1], [0], [0], [1], [0, 0, 1, 1], [], []>} : vector<128x128xbf16>, vector<128x896xbf16>, vector<128x896xf32> -> vector<128x896xf32>
    %c0_15 = arith.constant 0 : index
    %c0_16 = arith.constant 0 : index
    %19 = vector.load %arg7[%c0_15, %c0_16] : memref<1x896xf32, #tpu.memory_space<vmem>>, vector<1x896xf32>
    %20 = vector.broadcast %19 : vector<1x896xf32> to vector<128x896xf32>
    %21 = arith.addf %18, %20 : vector<128x896xf32>
    %22 = arith.negf %21 : vector<128x896xf32>
    %23 = math.exp %22 : vector<128x896xf32>
    %cst_17 = arith.constant 1.000000e+00 : f32
    %24 = vector.broadcast %cst_17 : f32 to vector<128x896xf32>
    %25 = arith.addf %24, %23 : vector<128x896xf32>
    %26 = arith.divf %24, %25 : vector<128x896xf32>
    %c0_18 = arith.constant 0 : index
    %c0_19 = arith.constant 0 : index
    %27 = vector.load %arg8[%c0_18, %c0_19] : memref<128x896xf32, #tpu.memory_space<vmem>>, vector<128x896xf32>
    tpu.vector_store %arg8[%c0_18, %c0_19], %26 {strides = array<i32>} : memref<128x896xf32, #tpu.memory_space<vmem>>, vector<128x896xf32>,
    return
  }
  func.func @transform_0(%arg0: i32) -> (i32, i32) {
    %c0_i32 = arith.constant 0 : i32
    %c0_i32_0 = arith.constant 0 : i32
    return %arg0, %c0_i32 : i32, i32
  }
  func.func @transform_1(%arg0: i32) -> (i32, i32) {
    %c0_i32 = arith.constant 0 : i32
    %c0_i32_0 = arith.constant 0 : i32
    %c0_i32_1 = arith.constant 0 : i32
    return %c0_i32, %c0_i32_0 : i32, i32
  }
  func.func @transform_2(%arg0: i32) -> (i32, i32) {
    %c0_i32 = arith.constant 0 : i32
    %c0_i32_0 = arith.constant 0 : i32
    %c0_i32_1 = arith.constant 0 : i32
    return %c0_i32, %c0_i32_0 : i32, i32
  }
  func.func @transform_3(%arg0: i32) -> (i32, i32) {
    %c0_i32 = arith.constant 0 : i32
    %c0_i32_0 = arith.constant 0 : i32
    %c0_i32_1 = arith.constant 0 : i32
    return %c0_i32, %c0_i32_0 : i32, i32
  }
  func.func @transform_4(%arg0: i32) -> (i32, i32) {
    %c0_i32 = arith.constant 0 : i32
    %c0_i32_0 = arith.constant 0 : i32
    %c0_i32_1 = arith.constant 0 : i32
    return %c0_i32, %c0_i32_0 : i32, i32
  }
  func.func @transform_5(%arg0: i32) -> (i32, i32) {
    %c0_i32 = arith.constant 0 : i32
    %c0_i32_0 = arith.constant 0 : i32
    %c0_i32_1 = arith.constant 0 : i32
    return %c0_i32, %c0_i32_0 : i32, i32
  }
  func.func @transform_6(%arg0: i32) -> (i32, i32) {
    %c0_i32 = arith.constant 0 : i32
    %c0_i32_0 = arith.constant 0 : i32
    %c0_i32_1 = arith.constant 0 : i32
    return %c0_i32, %c0_i32_0 : i32, i32
  }
  func.func @transform_7(%arg0: i32) -> (i32, i32) {
    %c0_i32 = arith.constant 0 : i32
    %c0_i32_0 = arith.constant 0 : i32
    return %arg0, %c0_i32 : i32, i32
  }
}

</mosaic_0001>

<llo_original>
// kernel: tpu_custom_call.1
$region0: #{tpu_custom_call.1}
  #allocation0 [shape = 'u32[]', space=smem, size = 0x4, offset = 0x4, fixed_abs, tag = 'smem constant byte address 0x4 - core index']
  #allocation1 [shape = 'u32[144,128]{1,0:T(1,128)}', space=vmem, size = 0x12000, scoped, tag = 'internal scratch']
  %s0 = inlined_call_operand.hbm [shape: bf16[128,896], index: 0, kind: input, shape index: {}]
  %s1 = inlined_call_operand.hbm [shape: bf16[896,128], index: 1, kind: input, shape index: {}]
  %s2 = inlined_call_operand.vmem [shape: f32[1,128], index: 2, kind: input, shape index: {}]
  %s3 = inlined_call_operand.hbm [shape: bf16[128,128], index: 3, kind: input, shape index: {}]
  %s4 = inlined_call_operand.vmem [shape: f32[1,128], index: 4, kind: input, shape index: {}]
  %s5 = inlined_call_operand.hbm [shape: bf16[128,896], index: 5, kind: input, shape index: {}]
  %s6 = inlined_call_operand.vmem [shape: f32[1,896], index: 6, kind: input, shape index: {}]
  %s7 = inlined_call_operand.hbm [shape: f32[128,896], index: 7, kind: output, shape index: {}]
  %s8 = sld [smem:[#allocation0]]
  $region54: #{tpu_custom_call.1} parent=0
    _
  %s10 = ssub.s32 1, %s8
  %s11 = scalar_select 0, %s10, %s8
  $region1: #{tpu_custom_call.1} parent=0
    #allocation2 [shape = 'u8[229376]{0}', space=vmem, size = 0x38000, scoped, tag = 'input window, operand 0, single buffered']
    #allocation3 [shape = 's32[1]{0}', space=sflag, size = 0x4, scoped, tag = 'scoped memory for tpu_custom_call.1']
    #allocation4 [shape = 's32[1]{0}', space=sflag, size = 0x4, scoped, tag = 'scoped memory for tpu_custom_call.1']
    #allocation5 [shape = 'u8[229376]{0}', space=vmem, size = 0x38000, scoped, tag = 'input window, operand 1, single buffered']
    #allocation6 [shape = 's32[1]{0}', space=sflag, size = 0x4, scoped, tag = 'scoped memory for tpu_custom_call.1']
    #allocation7 [shape = 'u8[32768]{0}', space=vmem, size = 0x8000, scoped, tag = 'input window, operand 3, single buffered']
    #allocation8 [shape = 'u8[229376]{0}', space=vmem, size = 0x38000, scoped, tag = 'input window, operand 5, single buffered']
    #allocation9 [shape = 's32[1]{0}', space=sflag, size = 0x4, scoped, tag = 'scoped memory for tpu_custom_call.1']
    #allocation10 [shape = 'u8[458752]{0}', space=vmem, size = 0x70000, scoped, tag = 'output window, operand 0, single buffered']
    %12 = vsyncpa [#allocation3], 0
    %13 = vsyncpa [#allocation6], 0
    %14 = vsyncpa [#allocation9], 0
    %15 = vsyncpa [#allocation4], 0
    // Predicated region
    $region2: #{tpu_custom_call.1} parent=1 // pred_check
      _
    $region3: #{tpu_custom_call.1} parent=1 // pred_check_branch
      %17 = sbr.rel (0) target = $region5
    $region4: #{tpu_custom_call.1} parent=1 // pred_region
      %s19 = ssub.s32 7168, 7168
      %20 = vsyncadd [#allocation3], %s19
      %s21 = sshll.u32 [#allocation2], 4
      %s22 = int_to_ptr.vmem [resolvable:$true] %s21
      %27 = dma.hbm_to_vmem [thread:$0]  %s0, 7168, %s22, [#allocation3], 448, 448, 28
    $region5: #{tpu_custom_call.1} parent=1 // pred_fallthru
      _
    // Predicated region
    $region6: #{tpu_custom_call.1} parent=1 // pred_check
      _
    $region7: #{tpu_custom_call.1} parent=1 // pred_check_branch
      %29 = sbr.rel (0) target = $region9
    $region8: #{tpu_custom_call.1} parent=1 // pred_region
      %s31 = ssub.s32 7168, 7168
      %32 = vsyncadd [#allocation6], %s31
      %s33 = sshll.u32 [#allocation5], 4
      %s34 = int_to_ptr.vmem [resolvable:$true] %s33
      %39 = dma.hbm_to_vmem [thread:$0]  %s1, 7168, %s34, [#allocation6], 64, 64, 4
    $region9: #{tpu_custom_call.1} parent=1 // pred_fallthru
      _
    // Predicated region
    $region10: #{tpu_custom_call.1} parent=1 // pred_check
      _
    $region11: #{tpu_custom_call.1} parent=1 // pred_check_branch
      %41 = sbr.rel (0) target = $region13
    $region12: #{tpu_custom_call.1} parent=1 // pred_region
      _
    $region13: #{tpu_custom_call.1} parent=1 // pred_fallthru
      _
    // Predicated region
    $region14: #{tpu_custom_call.1} parent=1 // pred_check
      _
    $region15: #{tpu_custom_call.1} parent=1 // pred_check_branch
      %43 = sbr.rel (0) target = $region17
    $region16: #{tpu_custom_call.1} parent=1 // pred_region
      %s45 = ssub.s32 1024, 1024
      %46 = vsyncadd [#allocation6], %s45
      %s47 = sshll.u32 [#allocation7], 4
      %s48 = int_to_ptr.vmem [resolvable:$true] %s47
      %53 = dma.hbm_to_vmem [thread:$0]  %s3, 1024, %s48, [#allocation6], 64, 64, 4
    $region17: #{tpu_custom_call.1} parent=1 // pred_fallthru
      _
    // Predicated region
    $region18: #{tpu_custom_call.1} parent=1 // pred_check
      _
    $region19: #{tpu_custom_call.1} parent=1 // pred_check_branch
      %55 = sbr.rel (0) target = $region21
    $region20: #{tpu_custom_call.1} parent=1 // pred_region
      _
    $region21: #{tpu_custom_call.1} parent=1 // pred_fallthru
      _
    // Predicated region
    $region22: #{tpu_custom_call.1} parent=1 // pred_check
      _
    $region23: #{tpu_custom_call.1} parent=1 // pred_check_branch
      %57 = sbr.rel (0) target = $region25
    $region24: #{tpu_custom_call.1} parent=1 // pred_region
      %s59 = ssub.s32 7168, 7168
      %60 = vsyncadd [#allocation9], %s59
      %s61 = sshll.u32 [#allocation8], 4
      %s62 = int_to_ptr.vmem [resolvable:$true] %s61
      %67 = dma.hbm_to_vmem [thread:$0]  %s5, 7168, %s62, [#allocation9], 448, 448, 28
    $region25: #{tpu_custom_call.1} parent=1 // pred_fallthru
      _
    // Predicated region
    $region26: #{tpu_custom_call.1} parent=1 // pred_check
      _
    $region27: #{tpu_custom_call.1} parent=1 // pred_check_branch
      %69 = sbr.rel (0) target = $region29
    $region28: #{tpu_custom_call.1} parent=1 // pred_region
      _
    $region29: #{tpu_custom_call.1} parent=1 // pred_fallthru
      _
    // Predicated region
    $region30: #{tpu_custom_call.1} parent=1 // pred_check
      _
    $region31: #{tpu_custom_call.1} parent=1 // pred_check_branch
      %71 = sbr.rel (0) target = $region33
    $region32: #{tpu_custom_call.1} parent=1 // pred_region
      %72 = dma.done [#allocation3], 7168
    $region33: #{tpu_custom_call.1} parent=1 // pred_fallthru
      _
    // Predicated region
    $region34: #{tpu_custom_call.1} parent=1 // pred_check
      _
    $region35: #{tpu_custom_call.1} parent=1 // pred_check_branch
      %74 = sbr.rel (0) target = $region37
    $region36: #{tpu_custom_call.1} parent=1 // pred_region
      %75 = dma.done [#allocation6], 7168
    $region37: #{tpu_custom_call.1} parent=1 // pred_fallthru
      _
    // Predicated region
    $region38: #{tpu_custom_call.1} parent=1 // pred_check
      _
    $region39: #{tpu_custom_call.1} parent=1 // pred_check_branch
      %77 = sbr.rel (0) target = $region41
    $region40: #{tpu_custom_call.1} parent=1 // pred_region
      %78 = dma.done [#allocation6], 1024
    $region41: #{tpu_custom_call.1} parent=1 // pred_fallthru
      _
    // Predicated region
    $region42: #{tpu_custom_call.1} parent=1 // pred_check
      _
    $region43: #{tpu_custom_call.1} parent=1 // pred_check_branch
      %80 = sbr.rel (0) target = $region45
    $region44: #{tpu_custom_call.1} parent=1 // pred_region
      %81 = dma.done [#allocation9], 7168
    $region45: #{tpu_custom_call.1} parent=1 // pred_fallthru
      _
    %v83 = vld [vmem:[#allocation2] sm:$0xff]
    %v84 = vld [vmem:[#allocation2 + $0x8] sm:$0xff]
    %v85 = vld [vmem:[#allocation2 + $0x10] sm:$0xff]
    %v86 = vld [vmem:[#allocation2 + $0x18] sm:$0xf]
    %v87 = vld [vmem:[#allocation2 + $0x1c] sm:$0xff]
    %v88 = vld [vmem:[#allocation2 + $0x24] sm:$0xff]
    %v89 = vld [vmem:[#allocation2 + $0x2c] sm:$0xff]
    %v90 = vld [vmem:[#allocation2 + $0x34] sm:$0xf]
    %v91 = vld [vmem:[#allocation2 + $0x38] sm:$0xff]
    %v92 = vld [vmem:[#allocation2 + $0x40] sm:$0xff]
    %v93 = vld [vmem:[#allocation2 + $0x48] sm:$0xff]
    %v94 = vld [vmem:[#allocation2 + $0x50] sm:$0xf]
    %v95 = vld [vmem:[#allocation2 + $0x54] sm:$0xff]
    %v96 = vld [vmem:[#allocation2 + $0x5c] sm:$0xff]
    %v97 = vld [vmem:[#allocation2 + $0x64] sm:$0xff]
    %v98 = vld [vmem:[#allocation2 + $0x6c] sm:$0xf]
    %v99 = vld [vmem:[#allocation2 + $0x70] sm:$0xff]
    %v100 = vld [vmem:[#allocation2 + $0x78] sm:$0xff]
    %v101 = vld [vmem:[#allocation2 + $0x80] sm:$0xff]
    %v102 = vld [vmem:[#allocation2 + $0x88] sm:$0xf]
    %v103 = vld [vmem:[#allocation2 + $0x8c] sm:$0xff]
    %v104 = vld [vmem:[#allocation2 + $0x94] sm:$0xff]
    %v105 = vld [vmem:[#allocation2 + $0x9c] sm:$0xff]
    %v106 = vld [vmem:[#allocation2 + $0xa4] sm:$0xf]
    %v107 = vld [vmem:[#allocation2 + $0xa8] sm:$0xff]
    %v108 = vld [vmem:[#allocation2 + $0xb0] sm:$0xff]
    %v109 = vld [vmem:[#allocation2 + $0xb8] sm:$0xff]
    %v110 = vld [vmem:[#allocation2 + $0xc0] sm:$0xf]
    %v111 = vld [vmem:[#allocation2 + $0xc4] sm:$0xff]
    %v112 = vld [vmem:[#allocation2 + $0xcc] sm:$0xff]
    %v113 = vld [vmem:[#allocation2 + $0xd4] sm:$0xff]
    %v114 = vld [vmem:[#allocation2 + $0xdc] sm:$0xf]
    %v115 = vld [vmem:[#allocation2 + $0xe0] sm:$0xff]
    %v116 = vld [vmem:[#allocation2 + $0xe8] sm:$0xff]
    %v117 = vld [vmem:[#allocation2 + $0xf0] sm:$0xff]
    %v118 = vld [vmem:[#allocation2 + $0xf8] sm:$0xf]
    %v119 = vld [vmem:[#allocation2 + $0xfc] sm:$0xff]
    %v120 = vld [vmem:[#allocation2 + $0x104] sm:$0xff]
    %v121 = vld [vmem:[#allocation2 + $0x10c] sm:$0xff]
    %v122 = vld [vmem:[#allocation2 + $0x114] sm:$0xf]
    %v123 = vld [vmem:[#allocation2 + $0x118] sm:$0xff]
    %v124 = vld [vmem:[#allocation2 + $0x120] sm:$0xff]
    %v125 = vld [vmem:[#allocation2 + $0x128] sm:$0xff]
    %v126 = vld [vmem:[#allocation2 + $0x130] sm:$0xf]
    %v127 = vld [vmem:[#allocation2 + $0x134] sm:$0xff]
    %v128 = vld [vmem:[#allocation2 + $0x13c] sm:$0xff]
    %v129 = vld [vmem:[#allocation2 + $0x144] sm:$0xff]
    %v130 = vld [vmem:[#allocation2 + $0x14c] sm:$0xf]
    %v131 = vld [vmem:[#allocation2 + $0x150] sm:$0xff]
    %v132 = vld [vmem:[#allocation2 + $0x158] sm:$0xff]
    %v133 = vld [vmem:[#allocation2 + $0x160] sm:$0xff]
    %v134 = vld [vmem:[#allocation2 + $0x168] sm:$0xf]
    %v135 = vld [vmem:[#allocation2 + $0x16c] sm:$0xff]
    %v136 = vld [vmem:[#allocation2 + $0x174] sm:$0xff]
    %v137 = vld [vmem:[#allocation2 + $0x17c] sm:$0xff]
    %v138 = vld [vmem:[#allocation2 + $0x184] sm:$0xf]
    %v139 = vld [vmem:[#allocation2 + $0x188] sm:$0xff]
    %v140 = vld [vmem:[#allocation2 + $0x190] sm:$0xff]
    %v141 = vld [vmem:[#allocation2 + $0x198] sm:$0xff]
    %v142 = vld [vmem:[#allocation2 + $0x1a0] sm:$0xf]
    %v143 = vld [vmem:[#allocation2 + $0x1a4] sm:$0xff]
    %v144 = vld [vmem:[#allocation2 + $0x1ac] sm:$0xff]
    %v145 = vld [vmem:[#allocation2 + $0x1b4] sm:$0xff]
    %v146 = vld [vmem:[#allocation2 + $0x1bc] sm:$0xf]
    %v147 = vld [vmem:[#allocation5] sm:$0xf]
    %v148 = vld [vmem:[#allocation5 + $0x4] sm:$0xf]
    %v149 = vld [vmem:[#allocation5 + $0x8] sm:$0xf]
    %v150 = vld [vmem:[#allocation5 + $0xc] sm:$0xf]
    %v151 = vld [vmem:[#allocation5 + $0x10] sm:$0xf]
    %v152 = vld [vmem:[#allocation5 + $0x14] sm:$0xf]
    %v153 = vld [vmem:[#allocation5 + $0x18] sm:$0xf]
    %v154 = vld [vmem:[#allocation5 + $0x1c] sm:$0xf]
    %v155 = vld [vmem:[#allocation5 + $0x20] sm:$0xf]
    %v156 = vld [vmem:[#allocation5 + $0x24] sm:$0xf]
    %v157 = vld [vmem:[#allocation5 + $0x28] sm:$0xf]
    %v158 = vld [vmem:[#allocation5 + $0x2c] sm:$0xf]
    %v159 = vld [vmem:[#allocation5 + $0x30] sm:$0xf]
    %v160 = vld [vmem:[#allocation5 + $0x34] sm:$0xf]
    %v161 = vld [vmem:[#allocation5 + $0x38] sm:$0xf]
    %v162 = vld [vmem:[#allocation5 + $0x3c] sm:$0xf]
    %v163 = vld [vmem:[#allocation5 + $0x40] sm:$0xf]
    %v164 = vld [vmem:[#allocation5 + $0x44] sm:$0xf]
    %v165 = vld [vmem:[#allocation5 + $0x48] sm:$0xf]
    %v166 = vld [vmem:[#allocation5 + $0x4c] sm:$0xf]
    %v167 = vld [vmem:[#allocation5 + $0x50] sm:$0xf]
    %v168 = vld [vmem:[#allocation5 + $0x54] sm:$0xf]
    %v169 = vld [vmem:[#allocation5 + $0x58] sm:$0xf]
    %v170 = vld [vmem:[#allocation5 + $0x5c] sm:$0xf]
    %v171 = vld [vmem:[#allocation5 + $0x60] sm:$0xf]
    %v172 = vld [vmem:[#allocation5 + $0x64] sm:$0xf]
    %v173 = vld [vmem:[#allocation5 + $0x68] sm:$0xf]
    %v174 = vld [vmem:[#allocation5 + $0x6c] sm:$0xf]
    %v175 = vld [vmem:[#allocation5 + $0x70] sm:$0xf]
    %v176 = vld [vmem:[#allocation5 + $0x74] sm:$0xf]
    %v177 = vld [vmem:[#allocation5 + $0x78] sm:$0xf]
    %v178 = vld [vmem:[#allocation5 + $0x7c] sm:$0xf]
    %v179 = vld [vmem:[#allocation5 + $0x80] sm:$0xf]
    %v180 = vld [vmem:[#allocation5 + $0x84] sm:$0xf]
    %v181 = vld [vmem:[#allocation5 + $0x88] sm:$0xf]
    %v182 = vld [vmem:[#allocation5 + $0x8c] sm:$0xf]
    %v183 = vld [vmem:[#allocation5 + $0x90] sm:$0xf]
    %v184 = vld [vmem:[#allocation5 + $0x94] sm:$0xf]
    %v185 = vld [vmem:[#allocation5 + $0x98] sm:$0xf]
    %v186 = vld [vmem:[#allocation5 + $0x9c] sm:$0xf]
    %v187 = vld [vmem:[#allocation5 + $0xa0] sm:$0xf]
    %v188 = vld [vmem:[#allocation5 + $0xa4] sm:$0xf]
    %v189 = vld [vmem:[#allocation5 + $0xa8] sm:$0xf]
    %v190 = vld [vmem:[#allocation5 + $0xac] sm:$0xf]
    %v191 = vld [vmem:[#allocation5 + $0xb0] sm:$0xf]
    %v192 = vld [vmem:[#allocation5 + $0xb4] sm:$0xf]
    %v193 = vld [vmem:[#allocation5 + $0xb8] sm:$0xf]
    %v194 = vld [vmem:[#allocation5 + $0xbc] sm:$0xf]
    %v195 = vld [vmem:[#allocation5 + $0xc0] sm:$0xf]
    %v196 = vld [vmem:[#allocation5 + $0xc4] sm:$0xf]
    %v197 = vld [vmem:[#allocation5 + $0xc8] sm:$0xf]
    %v198 = vld [vmem:[#allocation5 + $0xcc] sm:$0xf]
    %v199 = vld [vmem:[#allocation5 + $0xd0] sm:$0xf]
    %v200 = vld [vmem:[#allocation5 + $0xd4] sm:$0xf]
    %v201 = vld [vmem:[#allocation5 + $0xd8] sm:$0xf]
    %v202 = vld [vmem:[#allocation5 + $0xdc] sm:$0xf]
    %v203 = vld [vmem:[#allocation5 + $0xe0] sm:$0xf]
    %v204 = vld [vmem:[#allocation5 + $0xe4] sm:$0xf]
    %v205 = vld [vmem:[#allocation5 + $0xe8] sm:$0xf]
    %v206 = vld [vmem:[#allocation5 + $0xec] sm:$0xf]
    %v207 = vld [vmem:[#allocation5 + $0xf0] sm:$0xf]
    %v208 = vld [vmem:[#allocation5 + $0xf4] sm:$0xf]
    %v209 = vld [vmem:[#allocation5 + $0xf8] sm:$0xf]
    %v210 = vld [vmem:[#allocation5 + $0xfc] sm:$0xf]
    %v211 = vld [vmem:[#allocation5 + $0x100] sm:$0xf]
    %v212 = vld [vmem:[#allocation5 + $0x104] sm:$0xf]
    %v213 = vld [vmem:[#allocation5 + $0x108] sm:$0xf]
    %v214 = vld [vmem:[#allocation5 + $0x10c] sm:$0xf]
    %v215 = vld [vmem:[#allocation5 + $0x110] sm:$0xf]
    %v216 = vld [vmem:[#allocation5 + $0x114] sm:$0xf]
    %v217 = vld [vmem:[#allocation5 + $0x118] sm:$0xf]
    %v218 = vld [vmem:[#allocation5 + $0x11c] sm:$0xf]
    %v219 = vld [vmem:[#allocation5 + $0x120] sm:$0xf]
    %v220 = vld [vmem:[#allocation5 + $0x124] sm:$0xf]
    %v221 = vld [vmem:[#allocation5 + $0x128] sm:$0xf]
    %v222 = vld [vmem:[#allocation5 + $0x12c] sm:$0xf]
    %v223 = vld [vmem:[#allocation5 + $0x130] sm:$0xf]
    %v224 = vld [vmem:[#allocation5 + $0x134] sm:$0xf]
    %v225 = vld [vmem:[#allocation5 + $0x138] sm:$0xf]
    %v226 = vld [vmem:[#allocation5 + $0x13c] sm:$0xf]
    %v227 = vld [vmem:[#allocation5 + $0x140] sm:$0xf]
    %v228 = vld [vmem:[#allocation5 + $0x144] sm:$0xf]
    %v229 = vld [vmem:[#allocation5 + $0x148] sm:$0xf]
    %v230 = vld [vmem:[#allocation5 + $0x14c] sm:$0xf]
    %v231 = vld [vmem:[#allocation5 + $0x150] sm:$0xf]
    %v232 = vld [vmem:[#allocation5 + $0x154] sm:$0xf]
    %v233 = vld [vmem:[#allocation5 + $0x158] sm:$0xf]
    %v234 = vld [vmem:[#allocation5 + $0x15c] sm:$0xf]
    %v235 = vld [vmem:[#allocation5 + $0x160] sm:$0xf]
    %v236 = vld [vmem:[#allocation5 + $0x164] sm:$0xf]
    %v237 = vld [vmem:[#allocation5 + $0x168] sm:$0xf]
    %v238 = vld [vmem:[#allocation5 + $0x16c] sm:$0xf]
    %v239 = vld [vmem:[#allocation5 + $0x170] sm:$0xf]
    %v240 = vld [vmem:[#allocation5 + $0x174] sm:$0xf]
    %v241 = vld [vmem:[#allocation5 + $0x178] sm:$0xf]
    %v242 = vld [vmem:[#allocation5 + $0x17c] sm:$0xf]
    %v243 = vld [vmem:[#allocation5 + $0x180] sm:$0xf]
    %v244 = vld [vmem:[#allocation5 + $0x184] sm:$0xf]
    %v245 = vld [vmem:[#allocation5 + $0x188] sm:$0xf]
    %v246 = vld [vmem:[#allocation5 + $0x18c] sm:$0xf]
    %v247 = vld [vmem:[#allocation5 + $0x190] sm:$0xf]
    %v248 = vld [vmem:[#allocation5 + $0x194] sm:$0xf]
    %v249 = vld [vmem:[#allocation5 + $0x198] sm:$0xf]
    %v250 = vld [vmem:[#allocation5 + $0x19c] sm:$0xf]
    %v251 = vld [vmem:[#allocation5 + $0x1a0] sm:$0xf]
    %v252 = vld [vmem:[#allocation5 + $0x1a4] sm:$0xf]
    %v253 = vld [vmem:[#allocation5 + $0x1a8] sm:$0xf]
    %v254 = vld [vmem:[#allocation5 + $0x1ac] sm:$0xf]
    %v255 = vld [vmem:[#allocation5 + $0x1b0] sm:$0xf]
    %v256 = vld [vmem:[#allocation5 + $0x1b4] sm:$0xf]
    %v257 = vld [vmem:[#allocation5 + $0x1b8] sm:$0xf]
    %v258 = vld [vmem:[#allocation5 + $0x1bc] sm:$0xf]
    %v259 = vld [vmem:[%s2] sm:$0x1]
    %v261 = vlaneseq
    %v262 = vshrl.u32 %v261, 7
    %v263 = vsub.s32 0, %v262
    %v264 = vrot.slane %v259, %v263
    %v330 = vunpack.c.l.b16 %v83
    %v331 = vunpack.c.h.b16 %v83
    %v332 = vunpack.c.l.b16 %v84
    %v333 = vunpack.c.h.b16 %v84
    %v334 = vunpack.c.l.b16 %v85
    %v335 = vunpack.c.h.b16 %v85
    %v336 = vunpack.c.l.b16 %v86
    %v337 = vunpack.c.l.b16 %v87
    %v338 = vunpack.c.h.b16 %v87
    %v339 = vunpack.c.l.b16 %v88
    %v340 = vunpack.c.h.b16 %v88
    %v341 = vunpack.c.l.b16 %v89
    %v342 = vunpack.c.h.b16 %v89
    %v343 = vunpack.c.l.b16 %v90
    %v344 = vunpack.c.l.b16 %v91
    %v345 = vunpack.c.h.b16 %v91
    %v346 = vunpack.c.l.b16 %v92
    %v347 = vunpack.c.h.b16 %v92
    %v348 = vunpack.c.l.b16 %v93
    %v349 = vunpack.c.h.b16 %v93
    %v350 = vunpack.c.l.b16 %v94
    %v351 = vunpack.c.l.b16 %v95
    %v352 = vunpack.c.h.b16 %v95
    %v353 = vunpack.c.l.b16 %v96
    %v354 = vunpack.c.h.b16 %v96
    %v355 = vunpack.c.l.b16 %v97
    %v356 = vunpack.c.h.b16 %v97
    %v357 = vunpack.c.l.b16 %v98
    %v358 = vunpack.c.l.b16 %v99
    %v359 = vunpack.c.h.b16 %v99
    %v360 = vunpack.c.l.b16 %v100
    %v361 = vunpack.c.h.b16 %v100
    %v362 = vunpack.c.l.b16 %v101
    %v363 = vunpack.c.h.b16 %v101
    %v364 = vunpack.c.l.b16 %v102
    %v365 = vunpack.c.l.b16 %v103
    %v366 = vunpack.c.h.b16 %v103
    %v367 = vunpack.c.l.b16 %v104
    %v368 = vunpack.c.h.b16 %v104
    %v369 = vunpack.c.l.b16 %v105
    %v370 = vunpack.c.h.b16 %v105
    %v371 = vunpack.c.l.b16 %v106
    %v372 = vunpack.c.l.b16 %v107
    %v373 = vunpack.c.h.b16 %v107
    %v374 = vunpack.c.l.b16 %v108
    %v375 = vunpack.c.h.b16 %v108
    %v376 = vunpack.c.l.b16 %v109
    %v377 = vunpack.c.h.b16 %v109
    %v378 = vunpack.c.l.b16 %v110
    %v379 = vunpack.c.l.b16 %v111
    %v380 = vunpack.c.h.b16 %v111
    %v381 = vunpack.c.l.b16 %v112
    %v382 = vunpack.c.h.b16 %v112
    %v383 = vunpack.c.l.b16 %v113
    %v384 = vunpack.c.h.b16 %v113
    %v385 = vunpack.c.l.b16 %v114
    %v386 = vunpack.c.l.b16 %v115
    %v387 = vunpack.c.h.b16 %v115
    %v388 = vunpack.c.l.b16 %v116
    %v389 = vunpack.c.h.b16 %v116
    %v390 = vunpack.c.l.b16 %v117
    %v391 = vunpack.c.h.b16 %v117
    %v392 = vunpack.c.l.b16 %v118
    %v393 = vunpack.c.l.b16 %v119
    %v394 = vunpack.c.h.b16 %v119
    %v395 = vunpack.c.l.b16 %v120
    %v396 = vunpack.c.h.b16 %v120
    %v397 = vunpack.c.l.b16 %v121
    %v398 = vunpack.c.h.b16 %v121
    %v399 = vunpack.c.l.b16 %v122
    %v400 = vunpack.c.l.b16 %v123
    %v401 = vunpack.c.h.b16 %v123
    %v402 = vunpack.c.l.b16 %v124
    %v403 = vunpack.c.h.b16 %v124
    %v404 = vunpack.c.l.b16 %v125
    %v405 = vunpack.c.h.b16 %v125
    %v406 = vunpack.c.l.b16 %v126
    %v407 = vunpack.c.l.b16 %v127
    %v408 = vunpack.c.h.b16 %v127
    %v409 = vunpack.c.l.b16 %v128
    %v410 = vunpack.c.h.b16 %v128
    %v411 = vunpack.c.l.b16 %v129
    %v412 = vunpack.c.h.b16 %v129
    %v413 = vunpack.c.l.b16 %v130
    %v414 = vunpack.c.l.b16 %v131
    %v415 = vunpack.c.h.b16 %v131
    %v416 = vunpack.c.l.b16 %v132
    %v417 = vunpack.c.h.b16 %v132
    %v418 = vunpack.c.l.b16 %v133
    %v419 = vunpack.c.h.b16 %v133
    %v420 = vunpack.c.l.b16 %v134
    %v421 = vunpack.c.l.b16 %v135
    %v422 = vunpack.c.h.b16 %v135
    %v423 = vunpack.c.l.b16 %v136
    %v424 = vunpack.c.h.b16 %v136
    %v425 = vunpack.c.l.b16 %v137
    %v426 = vunpack.c.h.b16 %v137
    %v427 = vunpack.c.l.b16 %v138
    %v428 = vunpack.c.l.b16 %v139
    %v429 = vunpack.c.h.b16 %v139
    %v430 = vunpack.c.l.b16 %v140
    %v431 = vunpack.c.h.b16 %v140
    %v432 = vunpack.c.l.b16 %v141
    %v433 = vunpack.c.h.b16 %v141
    %v434 = vunpack.c.l.b16 %v142
    %v435 = vunpack.c.l.b16 %v143
    %v436 = vunpack.c.h.b16 %v143
    %v437 = vunpack.c.l.b16 %v144
    %v438 = vunpack.c.h.b16 %v144
    %v439 = vunpack.c.l.b16 %v145
    %v440 = vunpack.c.h.b16 %v145
    %v441 = vunpack.c.l.b16 %v146
    %v442 = vpack.c.b16 %v337, %v330
    %v443 = vpack.c.b16 %v338, %v331
    %v444 = vpack.c.b16 %v339, %v332
    %v445 = vpack.c.b16 %v340, %v333
    %v446 = vpack.c.b16 %v341, %v334
    %v447 = vpack.c.b16 %v342, %v335
    %v448 = vpack.c.b16 %v343, %v336
    %v449 = vpack.c.b16 %v351, %v344
    %v450 = vpack.c.b16 %v352, %v345
    %v451 = vpack.c.b16 %v353, %v346
    %v452 = vpack.c.b16 %v354, %v347
    %v453 = vpack.c.b16 %v355, %v348
    %v454 = vpack.c.b16 %v356, %v349
    %v455 = vpack.c.b16 %v357, %v350
    %v456 = vpack.c.b16 %v365, %v358
    %v457 = vpack.c.b16 %v366, %v359
    %v458 = vpack.c.b16 %v367, %v360
    %v459 = vpack.c.b16 %v368, %v361
    %v460 = vpack.c.b16 %v369, %v362
    %v461 = vpack.c.b16 %v370, %v363
    %v462 = vpack.c.b16 %v371, %v364
    %v463 = vpack.c.b16 %v379, %v372
    %v464 = vpack.c.b16 %v380, %v373
    %v465 = vpack.c.b16 %v381, %v374
    %v466 = vpack.c.b16 %v382, %v375
    %v467 = vpack.c.b16 %v383, %v376
    %v468 = vpack.c.b16 %v384, %v377
    %v469 = vpack.c.b16 %v385, %v378
    %v470 = vpack.c.b16 %v393, %v386
    %v471 = vpack.c.b16 %v394, %v387
    %v472 = vpack.c.b16 %v395, %v388
    %v473 = vpack.c.b16 %v396, %v389
    %v474 = vpack.c.b16 %v397, %v390
    %v475 = vpack.c.b16 %v398, %v391
    %v476 = vpack.c.b16 %v399, %v392
    %v477 = vpack.c.b16 %v407, %v400
    %v478 = vpack.c.b16 %v408, %v401
    %v479 = vpack.c.b16 %v409, %v402
    %v480 = vpack.c.b16 %v410, %v403
    %v481 = vpack.c.b16 %v411, %v404
    %v482 = vpack.c.b16 %v412, %v405
    %v483 = vpack.c.b16 %v413, %v406
    %v484 = vpack.c.b16 %v421, %v414
    %v485 = vpack.c.b16 %v422, %v415
    %v486 = vpack.c.b16 %v423, %v416
    %v487 = vpack.c.b16 %v424, %v417
    %v488 = vpack.c.b16 %v425, %v418
    %v489 = vpack.c.b16 %v426, %v419
    %v490 = vpack.c.b16 %v427, %v420
    %v491 = vpack.c.b16 %v435, %v428
    %v492 = vpack.c.b16 %v436, %v429
    %v493 = vpack.c.b16 %v437, %v430
    %v494 = vpack.c.b16 %v438, %v431
    %v495 = vpack.c.b16 %v439, %v432
    %v496 = vpack.c.b16 %v440, %v433
    %v497 = vpack.c.b16 %v441, %v434
    %v666 = vunpack.c.l.b16 %v147
    %v667 = vunpack.c.l.b16 %v148
    %v668 = vunpack.c.l.b16 %v149
    %v669 = vunpack.c.l.b16 %v150
    %v670 = vunpack.c.l.b16 %v151
    %v671 = vunpack.c.l.b16 %v152
    %v672 = vunpack.c.l.b16 %v153
    %v673 = vunpack.c.l.b16 %v154
    %v674 = vunpack.c.l.b16 %v155
    %v675 = vunpack.c.l.b16 %v156
    %v676 = vunpack.c.l.b16 %v157
    %v677 = vunpack.c.l.b16 %v158
    %v678 = vunpack.c.l.b16 %v159
    %v679 = vunpack.c.l.b16 %v160
    %v680 = vunpack.c.l.b16 %v161
    %v681 = vunpack.c.l.b16 %v162
    %v682 = vunpack.c.l.b16 %v163
    %v683 = vunpack.c.l.b16 %v164
    %v684 = vunpack.c.l.b16 %v165
    %v685 = vunpack.c.l.b16 %v166
    %v686 = vunpack.c.l.b16 %v167
    %v687 = vunpack.c.l.b16 %v168
    %v688 = vunpack.c.l.b16 %v169
    %v689 = vunpack.c.l.b16 %v170
    %v690 = vunpack.c.l.b16 %v171
    %v691 = vunpack.c.l.b16 %v172
    %v692 = vunpack.c.l.b16 %v173
    %v693 = vunpack.c.l.b16 %v174
    %v694 = vunpack.c.l.b16 %v175
    %v695 = vunpack.c.l.b16 %v176
    %v696 = vunpack.c.l.b16 %v177
    %v697 = vunpack.c.l.b16 %v178
    %v698 = vunpack.c.l.b16 %v179
    %v699 = vunpack.c.l.b16 %v180
    %v700 = vunpack.c.l.b16 %v181
    %v701 = vunpack.c.l.b16 %v182
    %v702 = vunpack.c.l.b16 %v183
    %v703 = vunpack.c.l.b16 %v184
    %v704 = vunpack.c.l.b16 %v185
    %v705 = vunpack.c.l.b16 %v186
    %v706 = vunpack.c.l.b16 %v187
    %v707 = vunpack.c.l.b16 %v188
    %v708 = vunpack.c.l.b16 %v189
    %v709 = vunpack.c.l.b16 %v190
    %v710 = vunpack.c.l.b16 %v191
    %v711 = vunpack.c.l.b16 %v192
    %v712 = vunpack.c.l.b16 %v193
    %v713 = vunpack.c.l.b16 %v194
    %v714 = vunpack.c.l.b16 %v195
    %v715 = vunpack.c.l.b16 %v196
    %v716 = vunpack.c.l.b16 %v197
    %v717 = vunpack.c.l.b16 %v198
    %v718 = vunpack.c.l.b16 %v199
    %v719 = vunpack.c.l.b16 %v200
    %v720 = vunpack.c.l.b16 %v201
    %v721 = vunpack.c.l.b16 %v202
    %v722 = vunpack.c.l.b16 %v203
    %v723 = vunpack.c.l.b16 %v204
    %v724 = vunpack.c.l.b16 %v205
    %v725 = vunpack.c.l.b16 %v206
    %v726 = vunpack.c.l.b16 %v207
    %v727 = vunpack.c.l.b16 %v208
    %v728 = vunpack.c.l.b16 %v209
    %v729 = vunpack.c.l.b16 %v210
    %v730 = vunpack.c.l.b16 %v211
    %v731 = vunpack.c.l.b16 %v212
    %v732 = vunpack.c.l.b16 %v213
    %v733 = vunpack.c.l.b16 %v214
    %v734 = vunpack.c.l.b16 %v215
    %v735 = vunpack.c.l.b16 %v216
    %v736 = vunpack.c.l.b16 %v217
    %v737 = vunpack.c.l.b16 %v218
    %v738 = vunpack.c.l.b16 %v219
    %v739 = vunpack.c.l.b16 %v220
    %v740 = vunpack.c.l.b16 %v221
    %v741 = vunpack.c.l.b16 %v222
    %v742 = vunpack.c.l.b16 %v223
    %v743 = vunpack.c.l.b16 %v224
    %v744 = vunpack.c.l.b16 %v225
    %v745 = vunpack.c.l.b16 %v226
    %v746 = vunpack.c.l.b16 %v227
    %v747 = vunpack.c.l.b16 %v228
    %v748 = vunpack.c.l.b16 %v229
    %v749 = vunpack.c.l.b16 %v230
    %v750 = vunpack.c.l.b16 %v231
    %v751 = vunpack.c.l.b16 %v232
    %v752 = vunpack.c.l.b16 %v233
    %v753 = vunpack.c.l.b16 %v234
    %v754 = vunpack.c.l.b16 %v235
    %v755 = vunpack.c.l.b16 %v236
    %v756 = vunpack.c.l.b16 %v237
    %v757 = vunpack.c.l.b16 %v238
    %v758 = vunpack.c.l.b16 %v239
    %v759 = vunpack.c.l.b16 %v240
    %v760 = vunpack.c.l.b16 %v241
    %v761 = vunpack.c.l.b16 %v242
    %v762 = vunpack.c.l.b16 %v243
    %v763 = vunpack.c.l.b16 %v244
    %v764 = vunpack.c.l.b16 %v245
    %v765 = vunpack.c.l.b16 %v246
    %v766 = vunpack.c.l.b16 %v247
    %v767 = vunpack.c.l.b16 %v248
    %v768 = vunpack.c.l.b16 %v249
    %v769 = vunpack.c.l.b16 %v250
    %v770 = vunpack.c.l.b16 %v251
    %v771 = vunpack.c.l.b16 %v252
    %v772 = vunpack.c.l.b16 %v253
    %v773 = vunpack.c.l.b16 %v254
    %v774 = vunpack.c.l.b16 %v255
    %v775 = vunpack.c.l.b16 %v256
    %v776 = vunpack.c.l.b16 %v257
    %v777 = vunpack.c.l.b16 %v258
    %v778 = vpack.c.b16 %v667, %v666
    %v779 = vpack.c.b16 %v669, %v668
    %v780 = vpack.c.b16 %v671, %v670
    %v781 = vpack.c.b16 %v673, %v672
    %v782 = vpack.c.b16 %v675, %v674
    %v783 = vpack.c.b16 %v677, %v676
    %v784 = vpack.c.b16 %v679, %v678
    %v785 = vpack.c.b16 %v681, %v680
    %v786 = vpack.c.b16 %v683, %v682
    %v787 = vpack.c.b16 %v685, %v684
    %v788 = vpack.c.b16 %v687, %v686
    %v789 = vpack.c.b16 %v689, %v688
    %v790 = vpack.c.b16 %v691, %v690
    %v791 = vpack.c.b16 %v693, %v692
    %v792 = vpack.c.b16 %v695, %v694
    %v793 = vpack.c.b16 %v697, %v696
    %v794 = vpack.c.b16 %v699, %v698
    %v795 = vpack.c.b16 %v701, %v700
    %v796 = vpack.c.b16 %v703, %v702
    %v797 = vpack.c.b16 %v705, %v704
    %v798 = vpack.c.b16 %v707, %v706
    %v799 = vpack.c.b16 %v709, %v708
    %v800 = vpack.c.b16 %v711, %v710
    %v801 = vpack.c.b16 %v713, %v712
    %v802 = vpack.c.b16 %v715, %v714
    %v803 = vpack.c.b16 %v717, %v716
    %v804 = vpack.c.b16 %v719, %v718
    %v805 = vpack.c.b16 %v721, %v720
    %v806 = vpack.c.b16 %v723, %v722
    %v807 = vpack.c.b16 %v725, %v724
    %v808 = vpack.c.b16 %v727, %v726
    %v809 = vpack.c.b16 %v729, %v728
    %v810 = vpack.c.b16 %v731, %v730
    %v811 = vpack.c.b16 %v733, %v732
    %v812 = vpack.c.b16 %v735, %v734
    %v813 = vpack.c.b16 %v737, %v736
    %v814 = vpack.c.b16 %v739, %v738
    %v815 = vpack.c.b16 %v741, %v740
    %v816 = vpack.c.b16 %v743, %v742
    %v817 = vpack.c.b16 %v745, %v744
    %v818 = vpack.c.b16 %v747, %v746
    %v819 = vpack.c.b16 %v749, %v748
    %v820 = vpack.c.b16 %v751, %v750
    %v821 = vpack.c.b16 %v753, %v752
    %v822 = vpack.c.b16 %v755, %v754
    %v823 = vpack.c.b16 %v757, %v756
    %v824 = vpack.c.b16 %v759, %v758
    %v825 = vpack.c.b16 %v761, %v760
    %v826 = vpack.c.b16 %v763, %v762
    %v827 = vpack.c.b16 %v765, %v764
    %v828 = vpack.c.b16 %v767, %v766
    %v829 = vpack.c.b16 %v769, %v768
    %v830 = vpack.c.b16 %v771, %v770
    %v831 = vpack.c.b16 %v773, %v772
    %v832 = vpack.c.b16 %v775, %v774
    %v833 = vpack.c.b16 %v777, %v776
    %890 = vmatprep.subr.bf16.mxu0 0
    %891 = vmatpush1.bf16.msra.mxu0 %v785
    %892 = vmatprep.subr.bf16.mxu0 0
    %893 = vmatpush1.bf16.msra.mxu0 %v784
    %894 = vmatprep.subr.bf16.mxu0 0
    %895 = vmatpush1.bf16.msra.mxu0 %v783
    %896 = vmatprep.subr.bf16.mxu0 0
    %897 = vmatpush1.bf16.msra.mxu0 %v782
    %898 = vmatprep.subr.bf16.mxu0 0
    %899 = vmatpush1.bf16.msra.mxu0 %v781
    %900 = vmatprep.subr.bf16.mxu0 0
    %901 = vmatpush1.bf16.msra.mxu0 %v780
    %902 = vmatprep.subr.bf16.mxu0 0
    %903 = vmatpush1.bf16.msra.mxu0 %v779
    %904 = vmatprep.subr.bf16.mxu0 0
    %905 = vmatpush1.bf16.msra.mxu0 %v778
    %906 = vmatprep.subr.bf16.mxu0 0
    %907 = vmatpush2.bf16.msra.mxu0 %v793
    %908 = vmatprep.subr.bf16.mxu0 0
    %909 = vmatpush2.bf16.msra.mxu0 %v792
    %910 = vmatprep.subr.bf16.mxu0 0
    %911 = vmatpush2.bf16.msra.mxu0 %v791
    %912 = vmatprep.subr.bf16.mxu0 0
    %913 = vmatpush2.bf16.msra.mxu0 %v790
    %914 = vmatprep.subr.bf16.mxu0 0
    %915 = vmatpush2.bf16.msra.mxu0 %v789
    %916 = vmatprep.subr.bf16.mxu0 0
    %917 = vmatpush2.bf16.msra.mxu0 %v788
    %918 = vmatprep.subr.bf16.mxu0 0
    %919 = vmatpush2.bf16.msra.mxu0 %v787
    %920 = vmatprep.subr.bf16.mxu0 0
    %921 = vmatpush2.bf16.msra.mxu0 %v786
    %922 = vmatprep.mubr.bf16.mxu0 %v443
    %923 = vmatmul.mubr.bf16.gmra.mxu0 %v442
    %v924 = vpop.f32.mrf.mxu0
    %v925 = vadd.f32 %v264, %v924
    %v926 = vpop.f32.mrf.mxu0
    %v927 = vpop.f32.mrf.mxu0
    %v928 = vadd.f32 %v264, %v927
    %v929 = vpop.f32.mrf.mxu0
    %930 = vmatprep.mubr.bf16.mxu0 %v450
    %931 = vmatmul.mubr.bf16.gmra.mxu0 %v449
    %v932 = vpop.f32.mrf.mxu0
    %v933 = vadd.f32 %v264, %v932
    %v934 = vpop.f32.mrf.mxu0
    %v935 = vpop.f32.mrf.mxu0
    %v936 = vadd.f32 %v264, %v935
    %v937 = vpop.f32.mrf.mxu0
    %938 = vmatprep.mubr.bf16.mxu0 %v457
    %939 = vmatmul.mubr.bf16.gmra.mxu0 %v456
    %v940 = vpop.f32.mrf.mxu0
    %v941 = vadd.f32 %v264, %v940
    %v942 = vpop.f32.mrf.mxu0
    %v943 = vpop.f32.mrf.mxu0
    %v944 = vadd.f32 %v264, %v943
    %v945 = vpop.f32.mrf.mxu0
    %946 = vmatprep.mubr.bf16.mxu0 %v464
    %947 = vmatmul.mubr.bf16.gmra.mxu0 %v463
    %v948 = vpop.f32.mrf.mxu0
    %v949 = vadd.f32 %v264, %v948
    %v950 = vpop.f32.mrf.mxu0
    %v951 = vpop.f32.mrf.mxu0
    %v952 = vadd.f32 %v264, %v951
    %v953 = vpop.f32.mrf.mxu0
    %954 = vmatprep.mubr.bf16.mxu0 %v471
    %955 = vmatmul.mubr.bf16.gmra.mxu0 %v470
    %v956 = vpop.f32.mrf.mxu0
    %v957 = vadd.f32 %v264, %v956
    %v958 = vpop.f32.mrf.mxu0
    %v959 = vpop.f32.mrf.mxu0
    %v960 = vadd.f32 %v264, %v959
    %v961 = vpop.f32.mrf.mxu0
    %962 = vmatprep.mubr.bf16.mxu0 %v478
    %963 = vmatmul.mubr.bf16.gmra.mxu0 %v477
    %v964 = vpop.f32.mrf.mxu0
    %v965 = vadd.f32 %v264, %v964
    %v966 = vpop.f32.mrf.mxu0
    %v967 = vpop.f32.mrf.mxu0
    %v968 = vadd.f32 %v264, %v967
    %v969 = vpop.f32.mrf.mxu0
    %970 = vmatprep.mubr.bf16.mxu0 %v485
    %971 = vmatmul.mubr.bf16.gmra.mxu0 %v484
    %v972 = vpop.f32.mrf.mxu0
    %v973 = vadd.f32 %v264, %v972
    %v974 = vpop.f32.mrf.mxu0
    %v975 = vpop.f32.mrf.mxu0
    %v976 = vadd.f32 %v264, %v975
    %v977 = vpop.f32.mrf.mxu0
    %978 = vmatprep.mubr.bf16.mxu0 %v492
    %979 = vmatmul.mubr.bf16.gmra.mxu0 %v491
    %v980 = vpop.f32.mrf.mxu0
    %v981 = vadd.f32 %v264, %v980
    %v982 = vpop.f32.mrf.mxu0
    %v983 = vpop.f32.mrf.mxu0
    %v984 = vadd.f32 %v264, %v983
    %v985 = vpop.f32.mrf.mxu0
    %986 = vdwg.mxu0
    %987 = vmatprep.subr.bf16.mxu0 0
    %988 = vmatpush1.bf16.msra.mxu0 %v801
    %989 = vmatprep.subr.bf16.mxu0 0
    %990 = vmatpush1.bf16.msra.mxu0 %v800
    %991 = vmatprep.subr.bf16.mxu0 0
    %992 = vmatpush1.bf16.msra.mxu0 %v799
    %993 = vmatprep.subr.bf16.mxu0 0
    %994 = vmatpush1.bf16.msra.mxu0 %v798
    %995 = vmatprep.subr.bf16.mxu0 0
    %996 = vmatpush1.bf16.msra.mxu0 %v797
    %997 = vmatprep.subr.bf16.mxu0 0
    %998 = vmatpush1.bf16.msra.mxu0 %v796
    %999 = vmatprep.subr.bf16.mxu0 0
    %1000 = vmatpush1.bf16.msra.mxu0 %v795
    %1001 = vmatprep.subr.bf16.mxu0 0
    %1002 = vmatpush1.bf16.msra.mxu0 %v794
    %1003 = vmatprep.subr.bf16.mxu0 0
    %1004 = vmatpush2.bf16.msra.mxu0 %v809
    %1005 = vmatprep.subr.bf16.mxu0 0
    %1006 = vmatpush2.bf16.msra.mxu0 %v808
    %1007 = vmatprep.subr.bf16.mxu0 0
    %1008 = vmatpush2.bf16.msra.mxu0 %v807
    %1009 = vmatprep.subr.bf16.mxu0 0
    %1010 = vmatpush2.bf16.msra.mxu0 %v806
    %1011 = vmatprep.subr.bf16.mxu0 0
    %1012 = vmatpush2.bf16.msra.mxu0 %v805
    %1013 = vmatprep.subr.bf16.mxu0 0
    %1014 = vmatpush2.bf16.msra.mxu0 %v804
    %1015 = vmatprep.subr.bf16.mxu0 0
    %1016 = vmatpush2.bf16.msra.mxu0 %v803
    %1017 = vmatprep.subr.bf16.mxu0 0
    %1018 = vmatpush2.bf16.msra.mxu0 %v802
    %1019 = vmatprep.mubr.bf16.mxu0 %v445
    %1020 = vmatmul.mubr.bf16.gmra.mxu0 %v444
    %v1021 = vpop.f32.mrf.mxu0
    %v1022 = vadd.f32 %v925, %v1021
    %v1023 = vpop.f32.mrf.mxu0
    %v1024 = vpop.f32.mrf.mxu0
    %v1025 = vadd.f32 %v928, %v1024
    %v1026 = vpop.f32.mrf.mxu0
    %1027 = vmatprep.mubr.bf16.mxu0 %v452
    %1028 = vmatmul.mubr.bf16.gmra.mxu0 %v451
    %v1029 = vpop.f32.mrf.mxu0
    %v1030 = vadd.f32 %v933, %v1029
    %v1031 = vpop.f32.mrf.mxu0
    %v1032 = vpop.f32.mrf.mxu0
    %v1033 = vadd.f32 %v936, %v1032
    %v1034 = vpop.f32.mrf.mxu0
    %1035 = vmatprep.mubr.bf16.mxu0 %v459
    %1036 = vmatmul.mubr.bf16.gmra.mxu0 %v458
    %v1037 = vpop.f32.mrf.mxu0
    %v1038 = vadd.f32 %v941, %v1037
    %v1039 = vpop.f32.mrf.mxu0
    %v1040 = vpop.f32.mrf.mxu0
    %v1041 = vadd.f32 %v944, %v1040
    %v1042 = vpop.f32.mrf.mxu0
    %1043 = vmatprep.mubr.bf16.mxu0 %v466
    %1044 = vmatmul.mubr.bf16.gmra.mxu0 %v465
    %v1045 = vpop.f32.mrf.mxu0
    %v1046 = vadd.f32 %v949, %v1045
    %v1047 = vpop.f32.mrf.mxu0
    %v1048 = vpop.f32.mrf.mxu0
    %v1049 = vadd.f32 %v952, %v1048
    %v1050 = vpop.f32.mrf.mxu0
    %1051 = vmatprep.mubr.bf16.mxu0 %v473
    %1052 = vmatmul.mubr.bf16.gmra.mxu0 %v472
    %v1053 = vpop.f32.mrf.mxu0
    %v1054 = vadd.f32 %v957, %v1053
    %v1055 = vpop.f32.mrf.mxu0
    %v1056 = vpop.f32.mrf.mxu0
    %v1057 = vadd.f32 %v960, %v1056
    %v1058 = vpop.f32.mrf.mxu0
    %1059 = vmatprep.mubr.bf16.mxu0 %v480
    %1060 = vmatmul.mubr.bf16.gmra.mxu0 %v479
    %v1061 = vpop.f32.mrf.mxu0
    %v1062 = vadd.f32 %v965, %v1061
    %v1063 = vpop.f32.mrf.mxu0
    %v1064 = vpop.f32.mrf.mxu0
    %v1065 = vadd.f32 %v968, %v1064
    %v1066 = vpop.f32.mrf.mxu0
    %1067 = vmatprep.mubr.bf16.mxu0 %v487
    %1068 = vmatmul.mubr.bf16.gmra.mxu0 %v486
    %v1069 = vpop.f32.mrf.mxu0
    %v1070 = vadd.f32 %v973, %v1069
    %v1071 = vpop.f32.mrf.mxu0
    %v1072 = vpop.f32.mrf.mxu0
    %v1073 = vadd.f32 %v976, %v1072
    %v1074 = vpop.f32.mrf.mxu0
    %1075 = vmatprep.mubr.bf16.mxu0 %v494
    %1076 = vmatmul.mubr.bf16.gmra.mxu0 %v493
    %v1077 = vpop.f32.mrf.mxu0
    %v1078 = vadd.f32 %v981, %v1077
    %v1079 = vpop.f32.mrf.mxu0
    %v1080 = vpop.f32.mrf.mxu0
    %v1081 = vadd.f32 %v984, %v1080
    %v1082 = vpop.f32.mrf.mxu0
    %1083 = vdwg.mxu0
    %1084 = vmatprep.subr.bf16.mxu0 0
    %1085 = vmatpush1.bf16.msra.mxu0 %v817
    %1086 = vmatprep.subr.bf16.mxu0 0
    %1087 = vmatpush1.bf16.msra.mxu0 %v816
    %1088 = vmatprep.subr.bf16.mxu0 0
    %1089 = vmatpush1.bf16.msra.mxu0 %v815
    %1090 = vmatprep.subr.bf16.mxu0 0
    %1091 = vmatpush1.bf16.msra.mxu0 %v814
    %1092 = vmatprep.subr.bf16.mxu0 0
    %1093 = vmatpush1.bf16.msra.mxu0 %v813
    %1094 = vmatprep.subr.bf16.mxu0 0
    %1095 = vmatpush1.bf16.msra.mxu0 %v812
    %1096 = vmatprep.subr.bf16.mxu0 0
    %1097 = vmatpush1.bf16.msra.mxu0 %v811
    %1098 = vmatprep.subr.bf16.mxu0 0
    %1099 = vmatpush1.bf16.msra.mxu0 %v810
    %1100 = vmatprep.subr.bf16.mxu0 0
    %1101 = vmatpush2.bf16.msra.mxu0 %v825
    %1102 = vmatprep.subr.bf16.mxu0 0
    %1103 = vmatpush2.bf16.msra.mxu0 %v824
    %1104 = vmatprep.subr.bf16.mxu0 0
    %1105 = vmatpush2.bf16.msra.mxu0 %v823
    %1106 = vmatprep.subr.bf16.mxu0 0
    %1107 = vmatpush2.bf16.msra.mxu0 %v822
    %1108 = vmatprep.subr.bf16.mxu0 0
    %1109 = vmatpush2.bf16.msra.mxu0 %v821
    %1110 = vmatprep.subr.bf16.mxu0 0
    %1111 = vmatpush2.bf16.msra.mxu0 %v820
    %1112 = vmatprep.subr.bf16.mxu0 0
    %1113 = vmatpush2.bf16.msra.mxu0 %v819
    %1114 = vmatprep.subr.bf16.mxu0 0
    %1115 = vmatpush2.bf16.msra.mxu0 %v818
    %1116 = vmatprep.mubr.bf16.mxu0 %v447
    %1117 = vmatmul.mubr.bf16.gmra.mxu0 %v446
    %v1118 = vpop.f32.mrf.mxu0
    %v1119 = vadd.f32 %v1022, %v1118
    %v1120 = vpop.f32.mrf.mxu0
    %v1121 = vpop.f32.mrf.mxu0
    %v1122 = vadd.f32 %v1025, %v1121
    %v1123 = vpop.f32.mrf.mxu0
    %1124 = vmatprep.mubr.bf16.mxu0 %v454
    %1125 = vmatmul.mubr.bf16.gmra.mxu0 %v453
    %v1126 = vpop.f32.mrf.mxu0
    %v1127 = vadd.f32 %v1030, %v1126
    %v1128 = vpop.f32.mrf.mxu0
    %v1129 = vpop.f32.mrf.mxu0
    %v1130 = vadd.f32 %v1033, %v1129
    %v1131 = vpop.f32.mrf.mxu0
    %1132 = vmatprep.mubr.bf16.mxu0 %v461
    %1133 = vmatmul.mubr.bf16.gmra.mxu0 %v460
    %v1134 = vpop.f32.mrf.mxu0
    %v1135 = vadd.f32 %v1038, %v1134
    %v1136 = vpop.f32.mrf.mxu0
    %v1137 = vpop.f32.mrf.mxu0
    %v1138 = vadd.f32 %v1041, %v1137
    %v1139 = vpop.f32.mrf.mxu0
    %1140 = vmatprep.mubr.bf16.mxu0 %v468
    %1141 = vmatmul.mubr.bf16.gmra.mxu0 %v467
    %v1142 = vpop.f32.mrf.mxu0
    %v1143 = vadd.f32 %v1046, %v1142
    %v1144 = vpop.f32.mrf.mxu0
    %v1145 = vpop.f32.mrf.mxu0
    %v1146 = vadd.f32 %v1049, %v1145
    %v1147 = vpop.f32.mrf.mxu0
    %1148 = vmatprep.mubr.bf16.mxu0 %v475
    %1149 = vmatmul.mubr.bf16.gmra.mxu0 %v474
    %v1150 = vpop.f32.mrf.mxu0
    %v1151 = vadd.f32 %v1054, %v1150
    %v1152 = vpop.f32.mrf.mxu0
    %v1153 = vpop.f32.mrf.mxu0
    %v1154 = vadd.f32 %v1057, %v1153
    %v1155 = vpop.f32.mrf.mxu0
    %1156 = vmatprep.mubr.bf16.mxu0 %v482
    %1157 = vmatmul.mubr.bf16.gmra.mxu0 %v481
    %v1158 = vpop.f32.mrf.mxu0
    %v1159 = vadd.f32 %v1062, %v1158
    %v1160 = vpop.f32.mrf.mxu0
    %v1161 = vpop.f32.mrf.mxu0
    %v1162 = vadd.f32 %v1065, %v1161
    %v1163 = vpop.f32.mrf.mxu0
    %1164 = vmatprep.mubr.bf16.mxu0 %v489
    %1165 = vmatmul.mubr.bf16.gmra.mxu0 %v488
    %v1166 = vpop.f32.mrf.mxu0
    %v1167 = vadd.f32 %v1070, %v1166
    %v1168 = vpop.f32.mrf.mxu0
    %v1169 = vpop.f32.mrf.mxu0
    %v1170 = vadd.f32 %v1073, %v1169
    %v1171 = vpop.f32.mrf.mxu0
    %1172 = vmatprep.mubr.bf16.mxu0 %v496
    %1173 = vmatmul.mubr.bf16.gmra.mxu0 %v495
    %v1174 = vpop.f32.mrf.mxu0
    %v1175 = vadd.f32 %v1078, %v1174
    %v1176 = vpop.f32.mrf.mxu0
    %v1177 = vpop.f32.mrf.mxu0
    %v1178 = vadd.f32 %v1081, %v1177
    %v1179 = vpop.f32.mrf.mxu0
    %1180 = vdwg.mxu0
    %1181 = vmatprep.subr.bf16.mxu0 0
    %1182 = vmatpush1.bf16.msra.mxu0 %v833
    %1183 = vmatprep.subr.bf16.mxu0 0
    %1184 = vmatpush1.bf16.msra.mxu0 %v832
    %1185 = vmatprep.subr.bf16.mxu0 0
    %1186 = vmatpush1.bf16.msra.mxu0 %v831
    %1187 = vmatprep.subr.bf16.mxu0 0
    %1188 = vmatpush1.bf16.msra.mxu0 %v830
    %1189 = vmatprep.subr.bf16.mxu0 0
    %1190 = vmatpush1.bf16.msra.mxu0 %v829
    %1191 = vmatprep.subr.bf16.mxu0 0
    %1192 = vmatpush1.bf16.msra.mxu0 %v828
    %1193 = vmatprep.subr.bf16.mxu0 0
    %1194 = vmatpush1.bf16.msra.mxu0 %v827
    %1195 = vmatprep.subr.bf16.mxu0 0
    %1196 = vmatpush1.bf16.msra.mxu0 %v826
    %1197 = vmatprep.subr.bf16.mxu0 0
    %1198 = vmatpush2.bf16.msra.mxu0 0
    %1199 = vmatprep.subr.bf16.mxu0 0
    %1200 = vmatpush2.bf16.msra.mxu0 0
    %1201 = vmatprep.subr.bf16.mxu0 0
    %1202 = vmatpush2.bf16.msra.mxu0 0
    %1203 = vmatprep.subr.bf16.mxu0 0
    %1204 = vmatpush2.bf16.msra.mxu0 0
    %1205 = vmatprep.subr.bf16.mxu0 0
    %1206 = vmatpush2.bf16.msra.mxu0 0
    %1207 = vmatprep.subr.bf16.mxu0 0
    %1208 = vmatpush2.bf16.msra.mxu0 0
    %1209 = vmatprep.subr.bf16.mxu0 0
    %1210 = vmatpush2.bf16.msra.mxu0 0
    %1211 = vmatprep.subr.bf16.mxu0 0
    %1212 = vmatpush2.bf16.msra.mxu0 0
    %1213 = vmatprep.mubr.bf16.mxu0 0
    %1214 = vmatmul.mubr.bf16.gmra.mxu0 %v448
    %v1215 = vpop.f32.mrf.mxu0
    %v1216 = vadd.f32 %v1119, %v1215
    %v1217 = vpop.f32.mrf.mxu0
    %v1218 = vpop.f32.mrf.mxu0
    %v1219 = vadd.f32 %v1122, %v1218
    %v1220 = vpop.f32.mrf.mxu0
    %1221 = vmatprep.mubr.bf16.mxu0 0
    %1222 = vmatmul.mubr.bf16.gmra.mxu0 %v455
    %v1223 = vpop.f32.mrf.mxu0
    %v1224 = vadd.f32 %v1127, %v1223
    %v1225 = vpop.f32.mrf.mxu0
    %v1226 = vpop.f32.mrf.mxu0
    %v1227 = vadd.f32 %v1130, %v1226
    %v1228 = vpop.f32.mrf.mxu0
    %1229 = vmatprep.mubr.bf16.mxu0 0
    %1230 = vmatmul.mubr.bf16.gmra.mxu0 %v462
    %v1231 = vpop.f32.mrf.mxu0
    %v1232 = vadd.f32 %v1135, %v1231
    %v1233 = vpop.f32.mrf.mxu0
    %v1234 = vpop.f32.mrf.mxu0
    %v1235 = vadd.f32 %v1138, %v1234
    %v1236 = vpop.f32.mrf.mxu0
    %1237 = vmatprep.mubr.bf16.mxu0 0
    %1238 = vmatmul.mubr.bf16.gmra.mxu0 %v469
    %v1239 = vpop.f32.mrf.mxu0
    %v1240 = vadd.f32 %v1143, %v1239
    %v1241 = vpop.f32.mrf.mxu0
    %v1242 = vpop.f32.mrf.mxu0
    %v1243 = vadd.f32 %v1146, %v1242
    %v1244 = vpop.f32.mrf.mxu0
    %1245 = vmatprep.mubr.bf16.mxu0 0
    %1246 = vmatmul.mubr.bf16.gmra.mxu0 %v476
    %v1247 = vpop.f32.mrf.mxu0
    %v1248 = vadd.f32 %v1151, %v1247
    %v1249 = vpop.f32.mrf.mxu0
    %v1250 = vpop.f32.mrf.mxu0
    %v1251 = vadd.f32 %v1154, %v1250
    %v1252 = vpop.f32.mrf.mxu0
    %1253 = vmatprep.mubr.bf16.mxu0 0
    %1254 = vmatmul.mubr.bf16.gmra.mxu0 %v483
    %v1255 = vpop.f32.mrf.mxu0
    %v1256 = vadd.f32 %v1159, %v1255
    %v1257 = vpop.f32.mrf.mxu0
    %v1258 = vpop.f32.mrf.mxu0
    %v1259 = vadd.f32 %v1162, %v1258
    %v1260 = vpop.f32.mrf.mxu0
    %1261 = vmatprep.mubr.bf16.mxu0 0
    %1262 = vmatmul.mubr.bf16.gmra.mxu0 %v490
    %v1263 = vpop.f32.mrf.mxu0
    %v1264 = vadd.f32 %v1167, %v1263
    %v1265 = vpop.f32.mrf.mxu0
    %v1266 = vpop.f32.mrf.mxu0
    %v1267 = vadd.f32 %v1170, %v1266
    %v1268 = vpop.f32.mrf.mxu0
    %1269 = vmatprep.mubr.bf16.mxu0 0
    %1270 = vmatmul.mubr.bf16.gmra.mxu0 %v497
    %v1271 = vpop.f32.mrf.mxu0
    %v1272 = vadd.f32 %v1175, %v1271
    %v1273 = vpop.f32.mrf.mxu0
    %v1274 = vpop.f32.mrf.mxu0
    %v1275 = vadd.f32 %v1178, %v1274
    %v1276 = vpop.f32.mrf.mxu0
    %1277 = vdwg.mxu0
    %v1278 = vmax.f32 %v1216, 0.0
    %v1279 = vmax.f32 %v1219, 0.0
    %v1280 = vmax.f32 %v1224, 0.0
    %v1281 = vmax.f32 %v1227, 0.0
    %v1282 = vmax.f32 %v1232, 0.0
    %v1283 = vmax.f32 %v1235, 0.0
    %v1284 = vmax.f32 %v1240, 0.0
    %v1285 = vmax.f32 %v1243, 0.0
    %v1286 = vmax.f32 %v1248, 0.0
    %v1287 = vmax.f32 %v1251, 0.0
    %v1288 = vmax.f32 %v1256, 0.0
    %v1289 = vmax.f32 %v1259, 0.0
    %v1290 = vmax.f32 %v1264, 0.0
    %v1291 = vmax.f32 %v1267, 0.0
    %v1292 = vmax.f32 %v1272, 0.0
    %v1293 = vmax.f32 %v1275, 0.0
    %v1294 = vpack.c.bf16 %v1279, %v1278
    %v1295 = vpack.c.bf16 %v1281, %v1280
    %v1296 = vpack.c.bf16 %v1283, %v1282
    %v1297 = vpack.c.bf16 %v1285, %v1284
    %v1298 = vpack.c.bf16 %v1287, %v1286
    %v1299 = vpack.c.bf16 %v1289, %v1288
    %v1300 = vpack.c.bf16 %v1291, %v1290
    %v1301 = vpack.c.bf16 %v1293, %v1292
    %v1302 = vld [vmem:[#allocation7] sm:$0xf]
    %v1303 = vld [vmem:[#allocation7 + $0x4] sm:$0xf]
    %v1304 = vld [vmem:[#allocation7 + $0x8] sm:$0xf]
    %v1305 = vld [vmem:[#allocation7 + $0xc] sm:$0xf]
    %v1306 = vld [vmem:[#allocation7 + $0x10] sm:$0xf]
    %v1307 = vld [vmem:[#allocation7 + $0x14] sm:$0xf]
    %v1308 = vld [vmem:[#allocation7 + $0x18] sm:$0xf]
    %v1309 = vld [vmem:[#allocation7 + $0x1c] sm:$0xf]
    %v1310 = vld [vmem:[#allocation7 + $0x20] sm:$0xf]
    %v1311 = vld [vmem:[#allocation7 + $0x24] sm:$0xf]
    %v1312 = vld [vmem:[#allocation7 + $0x28] sm:$0xf]
    %v1313 = vld [vmem:[#allocation7 + $0x2c] sm:$0xf]
    %v1314 = vld [vmem:[#allocation7 + $0x30] sm:$0xf]
    %v1315 = vld [vmem:[#allocation7 + $0x34] sm:$0xf]
    %v1316 = vld [vmem:[#allocation7 + $0x38] sm:$0xf]
    %v1317 = vld [vmem:[#allocation7 + $0x3c] sm:$0xf]
    %v1318 = vld [vmem:[%s4] sm:$0x1]
    %v1320 = vlaneseq
    %v1321 = vshrl.u32 %v1320, 7
    %v1322 = vsub.s32 0, %v1321
    %v1323 = vrot.slane %v1318, %v1322
    %v1341 = vunpack.c.l.b16 %v1302
    %v1342 = vunpack.c.l.b16 %v1303
    %v1343 = vunpack.c.l.b16 %v1304
    %v1344 = vunpack.c.l.b16 %v1305
    %v1345 = vunpack.c.l.b16 %v1306
    %v1346 = vunpack.c.l.b16 %v1307
    %v1347 = vunpack.c.l.b16 %v1308
    %v1348 = vunpack.c.l.b16 %v1309
    %v1349 = vunpack.c.l.b16 %v1310
    %v1350 = vunpack.c.l.b16 %v1311
    %v1351 = vunpack.c.l.b16 %v1312
    %v1352 = vunpack.c.l.b16 %v1313
    %v1353 = vunpack.c.l.b16 %v1314
    %v1354 = vunpack.c.l.b16 %v1315
    %v1355 = vunpack.c.l.b16 %v1316
    %v1356 = vunpack.c.l.b16 %v1317
    %v1357 = vpack.c.b16 %v1342, %v1341
    %v1358 = vpack.c.b16 %v1344, %v1343
    %v1359 = vpack.c.b16 %v1346, %v1345
    %v1360 = vpack.c.b16 %v1348, %v1347
    %v1361 = vpack.c.b16 %v1350, %v1349
    %v1362 = vpack.c.b16 %v1352, %v1351
    %v1363 = vpack.c.b16 %v1354, %v1353
    %v1364 = vpack.c.b16 %v1356, %v1355
    %1373 = vmatprep.subr.bf16.mxu0 0
    %1374 = vmatpush1.bf16.msra.mxu0 %v1364
    %1375 = vmatprep.subr.bf16.mxu0 0
    %1376 = vmatpush1.bf16.msra.mxu0 %v1363
    %1377 = vmatprep.subr.bf16.mxu0 0
    %1378 = vmatpush1.bf16.msra.mxu0 %v1362
    %1379 = vmatprep.subr.bf16.mxu0 0
    %1380 = vmatpush1.bf16.msra.mxu0 %v1361
    %1381 = vmatprep.subr.bf16.mxu0 0
    %1382 = vmatpush1.bf16.msra.mxu0 %v1360
    %1383 = vmatprep.subr.bf16.mxu0 0
    %1384 = vmatpush1.bf16.msra.mxu0 %v1359
    %1385 = vmatprep.subr.bf16.mxu0 0
    %1386 = vmatpush1.bf16.msra.mxu0 %v1358
    %1387 = vmatprep.subr.bf16.mxu0 0
    %1388 = vmatpush1.bf16.msra.mxu0 %v1357
    %1389 = vmatprep.subr.bf16.mxu0 0
    %1390 = vmatpush2.bf16.msra.mxu0 0
    %1391 = vmatprep.subr.bf16.mxu0 0
    %1392 = vmatpush2.bf16.msra.mxu0 0
    %1393 = vmatprep.subr.bf16.mxu0 0
    %1394 = vmatpush2.bf16.msra.mxu0 0
    %1395 = vmatprep.subr.bf16.mxu0 0
    %1396 = vmatpush2.bf16.msra.mxu0 0
    %1397 = vmatprep.subr.bf16.mxu0 0
    %1398 = vmatpush2.bf16.msra.mxu0 0
    %1399 = vmatprep.subr.bf16.mxu0 0
    %1400 = vmatpush2.bf16.msra.mxu0 0
    %1401 = vmatprep.subr.bf16.mxu0 0
    %1402 = vmatpush2.bf16.msra.mxu0 0
    %1403 = vmatprep.subr.bf16.mxu0 0
    %1404 = vmatpush2.bf16.msra.mxu0 0
    %1405 = vmatprep.mubr.bf16.mxu0 0
    %1406 = vmatmul.mubr.bf16.gmra.mxu0 %v1294
    %v1407 = vpop.f32.mrf.mxu0
    %v1408 = vadd.f32 %v1323, %v1407
    %v1409 = vpop.f32.mrf.mxu0
    %v1410 = vpop.f32.mrf.mxu0
    %v1411 = vadd.f32 %v1323, %v1410
    %v1412 = vpop.f32.mrf.mxu0
    %1413 = vmatprep.mubr.bf16.mxu0 0
    %1414 = vmatmul.mubr.bf16.gmra.mxu0 %v1295
    %v1415 = vpop.f32.mrf.mxu0
    %v1416 = vadd.f32 %v1323, %v1415
    %v1417 = vpop.f32.mrf.mxu0
    %v1418 = vpop.f32.mrf.mxu0
    %v1419 = vadd.f32 %v1323, %v1418
    %v1420 = vpop.f32.mrf.mxu0
    %1421 = vmatprep.mubr.bf16.mxu0 0
    %1422 = vmatmul.mubr.bf16.gmra.mxu0 %v1296
    %v1423 = vpop.f32.mrf.mxu0
    %v1424 = vadd.f32 %v1323, %v1423
    %v1425 = vpop.f32.mrf.mxu0
    %v1426 = vpop.f32.mrf.mxu0
    %v1427 = vadd.f32 %v1323, %v1426
    %v1428 = vpop.f32.mrf.mxu0
    %1429 = vmatprep.mubr.bf16.mxu0 0
    %1430 = vmatmul.mubr.bf16.gmra.mxu0 %v1297
    %v1431 = vpop.f32.mrf.mxu0
    %v1432 = vadd.f32 %v1323, %v1431
    %v1433 = vpop.f32.mrf.mxu0
    %v1434 = vpop.f32.mrf.mxu0
    %v1435 = vadd.f32 %v1323, %v1434
    %v1436 = vpop.f32.mrf.mxu0
    %1437 = vmatprep.mubr.bf16.mxu0 0
    %1438 = vmatmul.mubr.bf16.gmra.mxu0 %v1298
    %v1439 = vpop.f32.mrf.mxu0
    %v1440 = vadd.f32 %v1323, %v1439
    %v1441 = vpop.f32.mrf.mxu0
    %v1442 = vpop.f32.mrf.mxu0
    %v1443 = vadd.f32 %v1323, %v1442
    %v1444 = vpop.f32.mrf.mxu0
    %1445 = vmatprep.mubr.bf16.mxu0 0
    %1446 = vmatmul.mubr.bf16.gmra.mxu0 %v1299
    %v1447 = vpop.f32.mrf.mxu0
    %v1448 = vadd.f32 %v1323, %v1447
    %v1449 = vpop.f32.mrf.mxu0
    %v1450 = vpop.f32.mrf.mxu0
    %v1451 = vadd.f32 %v1323, %v1450
    %v1452 = vpop.f32.mrf.mxu0
    %1453 = vmatprep.mubr.bf16.mxu0 0
    %1454 = vmatmul.mubr.bf16.gmra.mxu0 %v1300
    %v1455 = vpop.f32.mrf.mxu0
    %v1456 = vadd.f32 %v1323, %v1455
    %v1457 = vpop.f32.mrf.mxu0
    %v1458 = vpop.f32.mrf.mxu0
    %v1459 = vadd.f32 %v1323, %v1458
    %v1460 = vpop.f32.mrf.mxu0
    %1461 = vmatprep.mubr.bf16.mxu0 0
    %1462 = vmatmul.mubr.bf16.gmra.mxu0 %v1301
    %v1463 = vpop.f32.mrf.mxu0
    %v1464 = vadd.f32 %v1323, %v1463
    %v1465 = vpop.f32.mrf.mxu0
    %v1466 = vpop.f32.mrf.mxu0
    %v1467 = vadd.f32 %v1323, %v1466
    %v1468 = vpop.f32.mrf.mxu0
    %1469 = vdwg.mxu0
    %v1470 = vmax.f32 %v1408, 0.0
    %v1471 = vmax.f32 %v1411, 0.0
    %v1472 = vmax.f32 %v1416, 0.0
    %v1473 = vmax.f32 %v1419, 0.0
    %v1474 = vmax.f32 %v1424, 0.0
    %v1475 = vmax.f32 %v1427, 0.0
    %v1476 = vmax.f32 %v1432, 0.0
    %v1477 = vmax.f32 %v1435, 0.0
    %v1478 = vmax.f32 %v1440, 0.0
    %v1479 = vmax.f32 %v1443, 0.0
    %v1480 = vmax.f32 %v1448, 0.0
    %v1481 = vmax.f32 %v1451, 0.0
    %v1482 = vmax.f32 %v1456, 0.0
    %v1483 = vmax.f32 %v1459, 0.0
    %v1484 = vmax.f32 %v1464, 0.0
    %v1485 = vmax.f32 %v1467, 0.0
    %v1486 = vpack.c.bf16 %v1471, %v1470
    %v1487 = vpack.c.bf16 %v1473, %v1472
    %v1488 = vpack.c.bf16 %v1475, %v1474
    %v1489 = vpack.c.bf16 %v1477, %v1476
    %v1490 = vpack.c.bf16 %v1479, %v1478
    %v1491 = vpack.c.bf16 %v1481, %v1480
    %v1492 = vpack.c.bf16 %v1483, %v1482
    %v1493 = vpack.c.bf16 %v1485, %v1484
    %v1494 = vld [vmem:[#allocation8] sm:$0xff]
    %v1495 = vld [vmem:[#allocation8 + $0x8] sm:$0xff]
    %v1496 = vld [vmem:[#allocation8 + $0x10] sm:$0xff]
    %v1497 = vld [vmem:[#allocation8 + $0x18] sm:$0xf]
    %v1498 = vld [vmem:[#allocation8 + $0x1c] sm:$0xff]
    %v1499 = vld [vmem:[#allocation8 + $0x24] sm:$0xff]
    %v1500 = vld [vmem:[#allocation8 + $0x2c] sm:$0xff]
    %v1501 = vld [vmem:[#allocation8 + $0x34] sm:$0xf]
    %v1502 = vld [vmem:[#allocation8 + $0x38] sm:$0xff]
    %v1503 = vld [vmem:[#allocation8 + $0x40] sm:$0xff]
    %v1504 = vld [vmem:[#allocation8 + $0x48] sm:$0xff]
    %v1505 = vld [vmem:[#allocation8 + $0x50] sm:$0xf]
    %v1506 = vld [vmem:[#allocation8 + $0x54] sm:$0xff]
    %v1507 = vld [vmem:[#allocation8 + $0x5c] sm:$0xff]
    %v1508 = vld [vmem:[#allocation8 + $0x64] sm:$0xff]
    %v1509 = vld [vmem:[#allocation8 + $0x6c] sm:$0xf]
    %v1510 = vld [vmem:[#allocation8 + $0x70] sm:$0xff]
    %v1511 = vld [vmem:[#allocation8 + $0x78] sm:$0xff]
    %v1512 = vld [vmem:[#allocation8 + $0x80] sm:$0xff]
    %v1513 = vld [vmem:[#allocation8 + $0x88] sm:$0xf]
    %v1514 = vld [vmem:[#allocation8 + $0x8c] sm:$0xff]
    %v1515 = vld [vmem:[#allocation8 + $0x94] sm:$0xff]
    %v1516 = vld [vmem:[#allocation8 + $0x9c] sm:$0xff]
    %v1517 = vld [vmem:[#allocation8 + $0xa4] sm:$0xf]
    %v1518 = vld [vmem:[#allocation8 + $0xa8] sm:$0xff]
    %v1519 = vld [vmem:[#allocation8 + $0xb0] sm:$0xff]
    %v1520 = vld [vmem:[#allocation8 + $0xb8] sm:$0xff]
    %v1521 = vld [vmem:[#allocation8 + $0xc0] sm:$0xf]
    %v1522 = vld [vmem:[#allocation8 + $0xc4] sm:$0xff]
    %v1523 = vld [vmem:[#allocation8 + $0xcc] sm:$0xff]
    %v1524 = vld [vmem:[#allocation8 + $0xd4] sm:$0xff]
    %v1525 = vld [vmem:[#allocation8 + $0xdc] sm:$0xf]
    %v1526 = vld [vmem:[#allocation8 + $0xe0] sm:$0xff]
    %v1527 = vld [vmem:[#allocation8 + $0xe8] sm:$0xff]
    %v1528 = vld [vmem:[#allocation8 + $0xf0] sm:$0xff]
    %v1529 = vld [vmem:[#allocation8 + $0xf8] sm:$0xf]
    %v1530 = vld [vmem:[#allocation8 + $0xfc] sm:$0xff]
    %v1531 = vld [vmem:[#allocation8 + $0x104] sm:$0xff]
    %v1532 = vld [vmem:[#allocation8 + $0x10c] sm:$0xff]
    %v1533 = vld [vmem:[#allocation8 + $0x114] sm:$0xf]
    %v1534 = vld [vmem:[#allocation8 + $0x118] sm:$0xff]
    %v1535 = vld [vmem:[#allocation8 + $0x120] sm:$0xff]
    %v1536 = vld [vmem:[#allocation8 + $0x128] sm:$0xff]
    %v1537 = vld [vmem:[#allocation8 + $0x130] sm:$0xf]
    %v1538 = vld [vmem:[#allocation8 + $0x134] sm:$0xff]
    %v1539 = vld [vmem:[#allocation8 + $0x13c] sm:$0xff]
    %v1540 = vld [vmem:[#allocation8 + $0x144] sm:$0xff]
    %v1541 = vld [vmem:[#allocation8 + $0x14c] sm:$0xf]
    %v1542 = vld [vmem:[#allocation8 + $0x150] sm:$0xff]
    %v1543 = vld [vmem:[#allocation8 + $0x158] sm:$0xff]
    %v1544 = vld [vmem:[#allocation8 + $0x160] sm:$0xff]
    %v1545 = vld [vmem:[#allocation8 + $0x168] sm:$0xf]
    %v1546 = vld [vmem:[#allocation8 + $0x16c] sm:$0xff]
    %v1547 = vld [vmem:[#allocation8 + $0x174] sm:$0xff]
    %v1548 = vld [vmem:[#allocation8 + $0x17c] sm:$0xff]
    %v1549 = vld [vmem:[#allocation8 + $0x184] sm:$0xf]
    %v1550 = vld [vmem:[#allocation8 + $0x188] sm:$0xff]
    %v1551 = vld [vmem:[#allocation8 + $0x190] sm:$0xff]
    %v1552 = vld [vmem:[#allocation8 + $0x198] sm:$0xff]
    %v1553 = vld [vmem:[#allocation8 + $0x1a0] sm:$0xf]
    %v1554 = vld [vmem:[#allocation8 + $0x1a4] sm:$0xff]
    %v1555 = vld [vmem:[#allocation8 + $0x1ac] sm:$0xff]
    %v1556 = vld [vmem:[#allocation8 + $0x1b4] sm:$0xff]
    %v1557 = vld [vmem:[#allocation8 + $0x1bc] sm:$0xf]
    %v1558 = vld [vmem:[%s6] sm:$0xff]
    %v1560 = vlaneseq
    %v1561 = vshrl.u32 %v1560, 7
    %v1562 = vsub.s32 0, %v1561
    %v1563 = vrot.slane %v1558, %v1562
    %v1564 = vlaneseq
    %v1565 = vshrl.u32 %v1564, 7
    %v1566 = vsub.s32 1, %v1565
    %v1567 = vrot.slane %v1558, %v1566
    %v1568 = vlaneseq
    %v1569 = vshrl.u32 %v1568, 7
    %v1570 = vsub.s32 2, %v1569
    %v1571 = vrot.slane %v1558, %v1570
    %v1572 = vlaneseq
    %v1573 = vshrl.u32 %v1572, 7
    %v1574 = vsub.s32 3, %v1573
    %v1575 = vrot.slane %v1558, %v1574
    %v1576 = vlaneseq
    %v1577 = vshrl.u32 %v1576, 7
    %v1578 = vsub.s32 4, %v1577
    %v1579 = vrot.slane %v1558, %v1578
    %v1580 = vlaneseq
    %v1581 = vshrl.u32 %v1580, 7
    %v1582 = vsub.s32 5, %v1581
    %v1583 = vrot.slane %v1558, %v1582
    %v1584 = vlaneseq
    %v1585 = vshrl.u32 %v1584, 7
    %v1586 = vsub.s32 6, %v1585
    %v1587 = vrot.slane %v1558, %v1586
    %v1659 = vunpack.c.l.b16 %v1494
    %v1660 = vunpack.c.h.b16 %v1494
    %v1661 = vunpack.c.l.b16 %v1495
    %v1662 = vunpack.c.h.b16 %v1495
    %v1663 = vunpack.c.l.b16 %v1496
    %v1664 = vunpack.c.h.b16 %v1496
    %v1665 = vunpack.c.l.b16 %v1497
    %v1666 = vunpack.c.l.b16 %v1498
    %v1667 = vunpack.c.h.b16 %v1498
    %v1668 = vunpack.c.l.b16 %v1499
    %v1669 = vunpack.c.h.b16 %v1499
    %v1670 = vunpack.c.l.b16 %v1500
    %v1671 = vunpack.c.h.b16 %v1500
    %v1672 = vunpack.c.l.b16 %v1501
    %v1673 = vunpack.c.l.b16 %v1502
    %v1674 = vunpack.c.h.b16 %v1502
    %v1675 = vunpack.c.l.b16 %v1503
    %v1676 = vunpack.c.h.b16 %v1503
    %v1677 = vunpack.c.l.b16 %v1504
    %v1678 = vunpack.c.h.b16 %v1504
    %v1679 = vunpack.c.l.b16 %v1505
    %v1680 = vunpack.c.l.b16 %v1506
    %v1681 = vunpack.c.h.b16 %v1506
    %v1682 = vunpack.c.l.b16 %v1507
    %v1683 = vunpack.c.h.b16 %v1507
    %v1684 = vunpack.c.l.b16 %v1508
    %v1685 = vunpack.c.h.b16 %v1508
    %v1686 = vunpack.c.l.b16 %v1509
    %v1687 = vunpack.c.l.b16 %v1510
    %v1688 = vunpack.c.h.b16 %v1510
    %v1689 = vunpack.c.l.b16 %v1511
    %v1690 = vunpack.c.h.b16 %v1511
    %v1691 = vunpack.c.l.b16 %v1512
    %v1692 = vunpack.c.h.b16 %v1512
    %v1693 = vunpack.c.l.b16 %v1513
    %v1694 = vunpack.c.l.b16 %v1514
    %v1695 = vunpack.c.h.b16 %v1514
    %v1696 = vunpack.c.l.b16 %v1515
    %v1697 = vunpack.c.h.b16 %v1515
    %v1698 = vunpack.c.l.b16 %v1516
    %v1699 = vunpack.c.h.b16 %v1516
    %v1700 = vunpack.c.l.b16 %v1517
    %v1701 = vunpack.c.l.b16 %v1518
    %v1702 = vunpack.c.h.b16 %v1518
    %v1703 = vunpack.c.l.b16 %v1519
    %v1704 = vunpack.c.h.b16 %v1519
    %v1705 = vunpack.c.l.b16 %v1520
    %v1706 = vunpack.c.h.b16 %v1520
    %v1707 = vunpack.c.l.b16 %v1521
    %v1708 = vunpack.c.l.b16 %v1522
    %v1709 = vunpack.c.h.b16 %v1522
    %v1710 = vunpack.c.l.b16 %v1523
    %v1711 = vunpack.c.h.b16 %v1523
    %v1712 = vunpack.c.l.b16 %v1524
    %v1713 = vunpack.c.h.b16 %v1524
    %v1714 = vunpack.c.l.b16 %v1525
    %v1715 = vunpack.c.l.b16 %v1526
    %v1716 = vunpack.c.h.b16 %v1526
    %v1717 = vunpack.c.l.b16 %v1527
    %v1718 = vunpack.c.h.b16 %v1527
    %v1719 = vunpack.c.l.b16 %v1528
    %v1720 = vunpack.c.h.b16 %v1528
    %v1721 = vunpack.c.l.b16 %v1529
    %v1722 = vunpack.c.l.b16 %v1530
    %v1723 = vunpack.c.h.b16 %v1530
    %v1724 = vunpack.c.l.b16 %v1531
    %v1725 = vunpack.c.h.b16 %v1531
    %v1726 = vunpack.c.l.b16 %v1532
    %v1727 = vunpack.c.h.b16 %v1532
    %v1728 = vunpack.c.l.b16 %v1533
    %v1729 = vunpack.c.l.b16 %v1534
    %v1730 = vunpack.c.h.b16 %v1534
    %v1731 = vunpack.c.l.b16 %v1535
    %v1732 = vunpack.c.h.b16 %v1535
    %v1733 = vunpack.c.l.b16 %v1536
    %v1734 = vunpack.c.h.b16 %v1536
    %v1735 = vunpack.c.l.b16 %v1537
    %v1736 = vunpack.c.l.b16 %v1538
    %v1737 = vunpack.c.h.b16 %v1538
    %v1738 = vunpack.c.l.b16 %v1539
    %v1739 = vunpack.c.h.b16 %v1539
    %v1740 = vunpack.c.l.b16 %v1540
    %v1741 = vunpack.c.h.b16 %v1540
    %v1742 = vunpack.c.l.b16 %v1541
    %v1743 = vunpack.c.l.b16 %v1542
    %v1744 = vunpack.c.h.b16 %v1542
    %v1745 = vunpack.c.l.b16 %v1543
    %v1746 = vunpack.c.h.b16 %v1543
    %v1747 = vunpack.c.l.b16 %v1544
    %v1748 = vunpack.c.h.b16 %v1544
    %v1749 = vunpack.c.l.b16 %v1545
    %v1750 = vunpack.c.l.b16 %v1546
    %v1751 = vunpack.c.h.b16 %v1546
    %v1752 = vunpack.c.l.b16 %v1547
    %v1753 = vunpack.c.h.b16 %v1547
    %v1754 = vunpack.c.l.b16 %v1548
    %v1755 = vunpack.c.h.b16 %v1548
    %v1756 = vunpack.c.l.b16 %v1549
    %v1757 = vunpack.c.l.b16 %v1550
    %v1758 = vunpack.c.h.b16 %v1550
    %v1759 = vunpack.c.l.b16 %v1551
    %v1760 = vunpack.c.h.b16 %v1551
    %v1761 = vunpack.c.l.b16 %v1552
    %v1762 = vunpack.c.h.b16 %v1552
    %v1763 = vunpack.c.l.b16 %v1553
    %v1764 = vunpack.c.l.b16 %v1554
    %v1765 = vunpack.c.h.b16 %v1554
    %v1766 = vunpack.c.l.b16 %v1555
    %v1767 = vunpack.c.h.b16 %v1555
    %v1768 = vunpack.c.l.b16 %v1556
    %v1769 = vunpack.c.h.b16 %v1556
    %v1770 = vunpack.c.l.b16 %v1557
    %v1771 = vpack.c.b16 %v1666, %v1659
    %v1772 = vpack.c.b16 %v1667, %v1660
    %v1773 = vpack.c.b16 %v1668, %v1661
    %v1774 = vpack.c.b16 %v1669, %v1662
    %v1775 = vpack.c.b16 %v1670, %v1663
    %v1776 = vpack.c.b16 %v1671, %v1664
    %v1777 = vpack.c.b16 %v1672, %v1665
    %v1778 = vpack.c.b16 %v1680, %v1673
    %v1779 = vpack.c.b16 %v1681, %v1674
    %v1780 = vpack.c.b16 %v1682, %v1675
    %v1781 = vpack.c.b16 %v1683, %v1676
    %v1782 = vpack.c.b16 %v1684, %v1677
    %v1783 = vpack.c.b16 %v1685, %v1678
    %v1784 = vpack.c.b16 %v1686, %v1679
    %v1785 = vpack.c.b16 %v1694, %v1687
    %v1786 = vpack.c.b16 %v1695, %v1688
    %v1787 = vpack.c.b16 %v1696, %v1689
    %v1788 = vpack.c.b16 %v1697, %v1690
    %v1789 = vpack.c.b16 %v1698, %v1691
    %v1790 = vpack.c.b16 %v1699, %v1692
    %v1791 = vpack.c.b16 %v1700, %v1693
    %v1792 = vpack.c.b16 %v1708, %v1701
    %v1793 = vpack.c.b16 %v1709, %v1702
    %v1794 = vpack.c.b16 %v1710, %v1703
    %v1795 = vpack.c.b16 %v1711, %v1704
    %v1796 = vpack.c.b16 %v1712, %v1705
    %v1797 = vpack.c.b16 %v1713, %v1706
    %v1798 = vpack.c.b16 %v1714, %v1707
    %v1799 = vpack.c.b16 %v1722, %v1715
    %v1800 = vpack.c.b16 %v1723, %v1716
    %v1801 = vpack.c.b16 %v1724, %v1717
    %v1802 = vpack.c.b16 %v1725, %v1718
    %v1803 = vpack.c.b16 %v1726, %v1719
    %v1804 = vpack.c.b16 %v1727, %v1720
    %v1805 = vpack.c.b16 %v1728, %v1721
    %v1806 = vpack.c.b16 %v1736, %v1729
    %v1807 = vpack.c.b16 %v1737, %v1730
    %v1808 = vpack.c.b16 %v1738, %v1731
    %v1809 = vpack.c.b16 %v1739, %v1732
    %v1810 = vpack.c.b16 %v1740, %v1733
    %v1811 = vpack.c.b16 %v1741, %v1734
    %v1812 = vpack.c.b16 %v1742, %v1735
    %v1813 = vpack.c.b16 %v1750, %v1743
    %v1814 = vpack.c.b16 %v1751, %v1744
    %v1815 = vpack.c.b16 %v1752, %v1745
    %v1816 = vpack.c.b16 %v1753, %v1746
    %v1817 = vpack.c.b16 %v1754, %v1747
    %v1818 = vpack.c.b16 %v1755, %v1748
    %v1819 = vpack.c.b16 %v1756, %v1749
    %v1820 = vpack.c.b16 %v1764, %v1757
    %v1821 = vpack.c.b16 %v1765, %v1758
    %v1822 = vpack.c.b16 %v1766, %v1759
    %v1823 = vpack.c.b16 %v1767, %v1760
    %v1824 = vpack.c.b16 %v1768, %v1761
    %v1825 = vpack.c.b16 %v1769, %v1762
    %v1826 = vpack.c.b16 %v1770, %v1763
    %1883 = vmatprep.subr.bf16.mxu0 %v1821
    %1884 = vmatpush1.bf16.msra.mxu0 %v1820
    %1885 = vmatprep.subr.bf16.mxu0 %v1814
    %1886 = vmatpush1.bf16.msra.mxu0 %v1813
    %1887 = vmatprep.subr.bf16.mxu0 %v1807
    %1888 = vmatpush1.bf16.msra.mxu0 %v1806
    %1889 = vmatprep.subr.bf16.mxu0 %v1800
    %1890 = vmatpush1.bf16.msra.mxu0 %v1799
    %1891 = vmatprep.subr.bf16.mxu0 %v1793
    %1892 = vmatpush1.bf16.msra.mxu0 %v1792
    %1893 = vmatprep.subr.bf16.mxu0 %v1786
    %1894 = vmatpush1.bf16.msra.mxu0 %v1785
    %1895 = vmatprep.subr.bf16.mxu0 %v1779
    %1896 = vmatpush1.bf16.msra.mxu0 %v1778
    %1897 = vmatprep.subr.bf16.mxu0 %v1772
    %1898 = vmatpush1.bf16.msra.mxu0 %v1771
    %1899 = vmatprep.subr.bf16.mxu0 0
    %1900 = vmatpush2.bf16.msra.mxu0 0
    %1901 = vmatprep.subr.bf16.mxu0 0
    %1902 = vmatpush2.bf16.msra.mxu0 0
    %1903 = vmatprep.subr.bf16.mxu0 0
    %1904 = vmatpush2.bf16.msra.mxu0 0
    %1905 = vmatprep.subr.bf16.mxu0 0
    %1906 = vmatpush2.bf16.msra.mxu0 0
    %1907 = vmatprep.subr.bf16.mxu0 0
    %1908 = vmatpush2.bf16.msra.mxu0 0
    %1909 = vmatprep.subr.bf16.mxu0 0
    %1910 = vmatpush2.bf16.msra.mxu0 0
    %1911 = vmatprep.subr.bf16.mxu0 0
    %1912 = vmatpush2.bf16.msra.mxu0 0
    %1913 = vmatprep.subr.bf16.mxu0 0
    %1914 = vmatpush2.bf16.msra.mxu0 0
    %1915 = vmatprep.mubr.bf16.mxu0 0
    %1916 = vmatmul.mubr.bf16.gmra.mxu0 %v1486
    %v1917 = vpop.f32.mrf.mxu0
    %v1918 = vadd.f32 %v1563, %v1917
    %v1919 = vpop.f32.mrf.mxu0
    %v1920 = vadd.f32 %v1567, %v1919
    %v1921 = vpop.f32.mrf.mxu0
    %v1922 = vadd.f32 %v1563, %v1921
    %v1923 = vpop.f32.mrf.mxu0
    %v1924 = vadd.f32 %v1567, %v1923
    %1925 = vmatprep.mubr.bf16.mxu0 0
    %1926 = vmatmul.mubr.bf16.gmra.mxu0 %v1487
    %v1927 = vpop.f32.mrf.mxu0
    %v1928 = vadd.f32 %v1563, %v1927
    %v1929 = vpop.f32.mrf.mxu0
    %v1930 = vadd.f32 %v1567, %v1929
    %v1931 = vpop.f32.mrf.mxu0
    %v1932 = vadd.f32 %v1563, %v1931
    %v1933 = vpop.f32.mrf.mxu0
    %v1934 = vadd.f32 %v1567, %v1933
    %1935 = vmatprep.mubr.bf16.mxu0 0
    %1936 = vmatmul.mubr.bf16.gmra.mxu0 %v1488
    %v1937 = vpop.f32.mrf.mxu0
    %v1938 = vadd.f32 %v1563, %v1937
    %v1939 = vpop.f32.mrf.mxu0
    %v1940 = vadd.f32 %v1567, %v1939
    %v1941 = vpop.f32.mrf.mxu0
    %v1942 = vadd.f32 %v1563, %v1941
    %v1943 = vpop.f32.mrf.mxu0
    %v1944 = vadd.f32 %v1567, %v1943
    %1945 = vmatprep.mubr.bf16.mxu0 0
    %1946 = vmatmul.mubr.bf16.gmra.mxu0 %v1489
    %v1947 = vpop.f32.mrf.mxu0
    %v1948 = vadd.f32 %v1563, %v1947
    %v1949 = vpop.f32.mrf.mxu0
    %v1950 = vadd.f32 %v1567, %v1949
    %v1951 = vpop.f32.mrf.mxu0
    %v1952 = vadd.f32 %v1563, %v1951
    %v1953 = vpop.f32.mrf.mxu0
    %v1954 = vadd.f32 %v1567, %v1953
    %1955 = vmatprep.mubr.bf16.mxu0 0
    %1956 = vmatmul.mubr.bf16.gmra.mxu0 %v1490
    %v1957 = vpop.f32.mrf.mxu0
    %v1958 = vadd.f32 %v1563, %v1957
    %v1959 = vpop.f32.mrf.mxu0
    %v1960 = vadd.f32 %v1567, %v1959
    %v1961 = vpop.f32.mrf.mxu0
    %v1962 = vadd.f32 %v1563, %v1961
    %v1963 = vpop.f32.mrf.mxu0
    %v1964 = vadd.f32 %v1567, %v1963
    %1965 = vmatprep.mubr.bf16.mxu0 0
    %1966 = vmatmul.mubr.bf16.gmra.mxu0 %v1491
    %v1967 = vpop.f32.mrf.mxu0
    %v1968 = vadd.f32 %v1563, %v1967
    %v1969 = vpop.f32.mrf.mxu0
    %v1970 = vadd.f32 %v1567, %v1969
    %v1971 = vpop.f32.mrf.mxu0
    %v1972 = vadd.f32 %v1563, %v1971
    %v1973 = vpop.f32.mrf.mxu0
    %v1974 = vadd.f32 %v1567, %v1973
    %1975 = vmatprep.mubr.bf16.mxu0 0
    %1976 = vmatmul.mubr.bf16.gmra.mxu0 %v1492
    %v1977 = vpop.f32.mrf.mxu0
    %v1978 = vadd.f32 %v1563, %v1977
    %v1979 = vpop.f32.mrf.mxu0
    %v1980 = vadd.f32 %v1567, %v1979
    %v1981 = vpop.f32.mrf.mxu0
    %v1982 = vadd.f32 %v1563, %v1981
    %v1983 = vpop.f32.mrf.mxu0
    %v1984 = vadd.f32 %v1567, %v1983
    %1985 = vmatprep.mubr.bf16.mxu0 0
    %1986 = vmatmul.mubr.bf16.gmra.mxu0 %v1493
    %v1987 = vpop.f32.mrf.mxu0
    %v1988 = vadd.f32 %v1563, %v1987
    %v1989 = vpop.f32.mrf.mxu0
    %v1990 = vadd.f32 %v1567, %v1989
    %v1991 = vpop.f32.mrf.mxu0
    %v1992 = vadd.f32 %v1563, %v1991
    %v1993 = vpop.f32.mrf.mxu0
    %v1994 = vadd.f32 %v1567, %v1993
    %1995 = vdwg.mxu0
    %1996 = vmatprep.subr.bf16.mxu0 %v1823
    %1997 = vmatpush1.bf16.msra.mxu0 %v1822
    %1998 = vmatprep.subr.bf16.mxu0 %v1816
    %1999 = vmatpush1.bf16.msra.mxu0 %v1815
    %2000 = vmatprep.subr.bf16.mxu0 %v1809
    %2001 = vmatpush1.bf16.msra.mxu0 %v1808
    %2002 = vmatprep.subr.bf16.mxu0 %v1802
    %2003 = vmatpush1.bf16.msra.mxu0 %v1801
    %2004 = vmatprep.subr.bf16.mxu0 %v1795
    %2005 = vmatpush1.bf16.msra.mxu0 %v1794
    %2006 = vmatprep.subr.bf16.mxu0 %v1788
    %2007 = vmatpush1.bf16.msra.mxu0 %v1787
    %2008 = vmatprep.subr.bf16.mxu0 %v1781
    %2009 = vmatpush1.bf16.msra.mxu0 %v1780
    %2010 = vmatprep.subr.bf16.mxu0 %v1774
    %2011 = vmatpush1.bf16.msra.mxu0 %v1773
    %2012 = vmatprep.subr.bf16.mxu0 0
    %2013 = vmatpush2.bf16.msra.mxu0 0
    %2014 = vmatprep.subr.bf16.mxu0 0
    %2015 = vmatpush2.bf16.msra.mxu0 0
    %2016 = vmatprep.subr.bf16.mxu0 0
    %2017 = vmatpush2.bf16.msra.mxu0 0
    %2018 = vmatprep.subr.bf16.mxu0 0
    %2019 = vmatpush2.bf16.msra.mxu0 0
    %2020 = vmatprep.subr.bf16.mxu0 0
    %2021 = vmatpush2.bf16.msra.mxu0 0
    %2022 = vmatprep.subr.bf16.mxu0 0
    %2023 = vmatpush2.bf16.msra.mxu0 0
    %2024 = vmatprep.subr.bf16.mxu0 0
    %2025 = vmatpush2.bf16.msra.mxu0 0
    %2026 = vmatprep.subr.bf16.mxu0 0
    %2027 = vmatpush2.bf16.msra.mxu0 0
    %2028 = vmatprep.mubr.bf16.mxu0 0
    %2029 = vmatmul.mubr.bf16.gmra.mxu0 %v1486
    %v2030 = vpop.f32.mrf.mxu0
    %v2031 = vadd.f32 %v1571, %v2030
    %v2032 = vpop.f32.mrf.mxu0
    %v2033 = vadd.f32 %v1575, %v2032
    %v2034 = vpop.f32.mrf.mxu0
    %v2035 = vadd.f32 %v1571, %v2034
    %v2036 = vpop.f32.mrf.mxu0
    %v2037 = vadd.f32 %v1575, %v2036
    %2038 = vmatprep.mubr.bf16.mxu0 0
    %2039 = vmatmul.mubr.bf16.gmra.mxu0 %v1487
    %v2040 = vpop.f32.mrf.mxu0
    %v2041 = vadd.f32 %v1571, %v2040
    %v2042 = vpop.f32.mrf.mxu0
    %v2043 = vadd.f32 %v1575, %v2042
    %v2044 = vpop.f32.mrf.mxu0
    %v2045 = vadd.f32 %v1571, %v2044
    %v2046 = vpop.f32.mrf.mxu0
    %v2047 = vadd.f32 %v1575, %v2046
    %2048 = vmatprep.mubr.bf16.mxu0 0
    %2049 = vmatmul.mubr.bf16.gmra.mxu0 %v1488
    %v2050 = vpop.f32.mrf.mxu0
    %v2051 = vadd.f32 %v1571, %v2050
    %v2052 = vpop.f32.mrf.mxu0
    %v2053 = vadd.f32 %v1575, %v2052
    %v2054 = vpop.f32.mrf.mxu0
    %v2055 = vadd.f32 %v1571, %v2054
    %v2056 = vpop.f32.mrf.mxu0
    %v2057 = vadd.f32 %v1575, %v2056
    %2058 = vmatprep.mubr.bf16.mxu0 0
    %2059 = vmatmul.mubr.bf16.gmra.mxu0 %v1489
    %v2060 = vpop.f32.mrf.mxu0
    %v2061 = vadd.f32 %v1571, %v2060
    %v2062 = vpop.f32.mrf.mxu0
    %v2063 = vadd.f32 %v1575, %v2062
    %v2064 = vpop.f32.mrf.mxu0
    %v2065 = vadd.f32 %v1571, %v2064
    %v2066 = vpop.f32.mrf.mxu0
    %v2067 = vadd.f32 %v1575, %v2066
    %2068 = vmatprep.mubr.bf16.mxu0 0
    %2069 = vmatmul.mubr.bf16.gmra.mxu0 %v1490
    %v2070 = vpop.f32.mrf.mxu0
    %v2071 = vadd.f32 %v1571, %v2070
    %v2072 = vpop.f32.mrf.mxu0
    %v2073 = vadd.f32 %v1575, %v2072
    %v2074 = vpop.f32.mrf.mxu0
    %v2075 = vadd.f32 %v1571, %v2074
    %v2076 = vpop.f32.mrf.mxu0
    %v2077 = vadd.f32 %v1575, %v2076
    %2078 = vmatprep.mubr.bf16.mxu0 0
    %2079 = vmatmul.mubr.bf16.gmra.mxu0 %v1491
    %v2080 = vpop.f32.mrf.mxu0
    %v2081 = vadd.f32 %v1571, %v2080
    %v2082 = vpop.f32.mrf.mxu0
    %v2083 = vadd.f32 %v1575, %v2082
    %v2084 = vpop.f32.mrf.mxu0
    %v2085 = vadd.f32 %v1571, %v2084
    %v2086 = vpop.f32.mrf.mxu0
    %v2087 = vadd.f32 %v1575, %v2086
    %2088 = vmatprep.mubr.bf16.mxu0 0
    %2089 = vmatmul.mubr.bf16.gmra.mxu0 %v1492
    %v2090 = vpop.f32.mrf.mxu0
    %v2091 = vadd.f32 %v1571, %v2090
    %v2092 = vpop.f32.mrf.mxu0
    %v2093 = vadd.f32 %v1575, %v2092
    %v2094 = vpop.f32.mrf.mxu0
    %v2095 = vadd.f32 %v1571, %v2094
    %v2096 = vpop.f32.mrf.mxu0
    %v2097 = vadd.f32 %v1575, %v2096
    %2098 = vmatprep.mubr.bf16.mxu0 0
    %2099 = vmatmul.mubr.bf16.gmra.mxu0 %v1493
    %v2100 = vpop.f32.mrf.mxu0
    %v2101 = vadd.f32 %v1571, %v2100
    %v2102 = vpop.f32.mrf.mxu0
    %v2103 = vadd.f32 %v1575, %v2102
    %v2104 = vpop.f32.mrf.mxu0
    %v2105 = vadd.f32 %v1571, %v2104
    %v2106 = vpop.f32.mrf.mxu0
    %v2107 = vadd.f32 %v1575, %v2106
    %2108 = vdwg.mxu0
    %2109 = vmatprep.subr.bf16.mxu0 %v1825
    %2110 = vmatpush1.bf16.msra.mxu0 %v1824
    %2111 = vmatprep.subr.bf16.mxu0 %v1818
    %2112 = vmatpush1.bf16.msra.mxu0 %v1817
    %2113 = vmatprep.subr.bf16.mxu0 %v1811
    %2114 = vmatpush1.bf16.msra.mxu0 %v1810
    %2115 = vmatprep.subr.bf16.mxu0 %v1804
    %2116 = vmatpush1.bf16.msra.mxu0 %v1803
    %2117 = vmatprep.subr.bf16.mxu0 %v1797
    %2118 = vmatpush1.bf16.msra.mxu0 %v1796
    %2119 = vmatprep.subr.bf16.mxu0 %v1790
    %2120 = vmatpush1.bf16.msra.mxu0 %v1789
    %2121 = vmatprep.subr.bf16.mxu0 %v1783
    %2122 = vmatpush1.bf16.msra.mxu0 %v1782
    %2123 = vmatprep.subr.bf16.mxu0 %v1776
    %2124 = vmatpush1.bf16.msra.mxu0 %v1775
    %2125 = vmatprep.subr.bf16.mxu0 0
    %2126 = vmatpush2.bf16.msra.mxu0 0
    %2127 = vmatprep.subr.bf16.mxu0 0
    %2128 = vmatpush2.bf16.msra.mxu0 0
    %2129 = vmatprep.subr.bf16.mxu0 0
    %2130 = vmatpush2.bf16.msra.mxu0 0
    %2131 = vmatprep.subr.bf16.mxu0 0
    %2132 = vmatpush2.bf16.msra.mxu0 0
    %2133 = vmatprep.subr.bf16.mxu0 0
    %2134 = vmatpush2.bf16.msra.mxu0 0
    %2135 = vmatprep.subr.bf16.mxu0 0
    %2136 = vmatpush2.bf16.msra.mxu0 0
    %2137 = vmatprep.subr.bf16.mxu0 0
    %2138 = vmatpush2.bf16.msra.mxu0 0
    %2139 = vmatprep.subr.bf16.mxu0 0
    %2140 = vmatpush2.bf16.msra.mxu0 0
    %2141 = vmatprep.mubr.bf16.mxu0 0
    %2142 = vmatmul.mubr.bf16.gmra.mxu0 %v1486
    %v2143 = vpop.f32.mrf.mxu0
    %v2144 = vadd.f32 %v1579, %v2143
    %v2145 = vpop.f32.mrf.mxu0
    %v2146 = vadd.f32 %v1583, %v2145
    %v2147 = vpop.f32.mrf.mxu0
    %v2148 = vadd.f32 %v1579, %v2147
    %v2149 = vpop.f32.mrf.mxu0
    %v2150 = vadd.f32 %v1583, %v2149
    %2151 = vmatprep.mubr.bf16.mxu0 0
    %2152 = vmatmul.mubr.bf16.gmra.mxu0 %v1487
    %v2153 = vpop.f32.mrf.mxu0
    %v2154 = vadd.f32 %v1579, %v2153
    %v2155 = vpop.f32.mrf.mxu0
    %v2156 = vadd.f32 %v1583, %v2155
    %v2157 = vpop.f32.mrf.mxu0
    %v2158 = vadd.f32 %v1579, %v2157
    %v2159 = vpop.f32.mrf.mxu0
    %v2160 = vadd.f32 %v1583, %v2159
    %2161 = vmatprep.mubr.bf16.mxu0 0
    %2162 = vmatmul.mubr.bf16.gmra.mxu0 %v1488
    %v2163 = vpop.f32.mrf.mxu0
    %v2164 = vadd.f32 %v1579, %v2163
    %v2165 = vpop.f32.mrf.mxu0
    %v2166 = vadd.f32 %v1583, %v2165
    %v2167 = vpop.f32.mrf.mxu0
    %v2168 = vadd.f32 %v1579, %v2167
    %v2169 = vpop.f32.mrf.mxu0
    %v2170 = vadd.f32 %v1583, %v2169
    %2171 = vmatprep.mubr.bf16.mxu0 0
    %2172 = vmatmul.mubr.bf16.gmra.mxu0 %v1489
    %v2173 = vpop.f32.mrf.mxu0
    %v2174 = vadd.f32 %v1579, %v2173
    %v2175 = vpop.f32.mrf.mxu0
    %v2176 = vadd.f32 %v1583, %v2175
    %v2177 = vpop.f32.mrf.mxu0
    %v2178 = vadd.f32 %v1579, %v2177
    %v2179 = vpop.f32.mrf.mxu0
    %v2180 = vadd.f32 %v1583, %v2179
    %2181 = vmatprep.mubr.bf16.mxu0 0
    %2182 = vmatmul.mubr.bf16.gmra.mxu0 %v1490
    %v2183 = vpop.f32.mrf.mxu0
    %v2184 = vadd.f32 %v1579, %v2183
    %v2185 = vpop.f32.mrf.mxu0
    %v2186 = vadd.f32 %v1583, %v2185
    %v2187 = vpop.f32.mrf.mxu0
    %v2188 = vadd.f32 %v1579, %v2187
    %v2189 = vpop.f32.mrf.mxu0
    %v2190 = vadd.f32 %v1583, %v2189
    %2191 = vmatprep.mubr.bf16.mxu0 0
    %2192 = vmatmul.mubr.bf16.gmra.mxu0 %v1491
    %v2193 = vpop.f32.mrf.mxu0
    %v2194 = vadd.f32 %v1579, %v2193
    %v2195 = vpop.f32.mrf.mxu0
    %v2196 = vadd.f32 %v1583, %v2195
    %v2197 = vpop.f32.mrf.mxu0
    %v2198 = vadd.f32 %v1579, %v2197
    %v2199 = vpop.f32.mrf.mxu0
    %v2200 = vadd.f32 %v1583, %v2199
    %2201 = vmatprep.mubr.bf16.mxu0 0
    %2202 = vmatmul.mubr.bf16.gmra.mxu0 %v1492
    %v2203 = vpop.f32.mrf.mxu0
    %v2204 = vadd.f32 %v1579, %v2203
    %v2205 = vpop.f32.mrf.mxu0
    %v2206 = vadd.f32 %v1583, %v2205
    %v2207 = vpop.f32.mrf.mxu0
    %v2208 = vadd.f32 %v1579, %v2207
    %v2209 = vpop.f32.mrf.mxu0
    %v2210 = vadd.f32 %v1583, %v2209
    %2211 = vmatprep.mubr.bf16.mxu0 0
    %2212 = vmatmul.mubr.bf16.gmra.mxu0 %v1493
    %v2213 = vpop.f32.mrf.mxu0
    %v2214 = vadd.f32 %v1579, %v2213
    %v2215 = vpop.f32.mrf.mxu0
    %v2216 = vadd.f32 %v1583, %v2215
    %v2217 = vpop.f32.mrf.mxu0
    %v2218 = vadd.f32 %v1579, %v2217
    %v2219 = vpop.f32.mrf.mxu0
    %v2220 = vadd.f32 %v1583, %v2219
    %2221 = vdwg.mxu0
    %2222 = vmatprep.subr.bf16.mxu0 0
    %2223 = vmatpush1.bf16.msra.mxu0 %v1826
    %2224 = vmatprep.subr.bf16.mxu0 0
    %2225 = vmatpush1.bf16.msra.mxu0 %v1819
    %2226 = vmatprep.subr.bf16.mxu0 0
    %2227 = vmatpush1.bf16.msra.mxu0 %v1812
    %2228 = vmatprep.subr.bf16.mxu0 0
    %2229 = vmatpush1.bf16.msra.mxu0 %v1805
    %2230 = vmatprep.subr.bf16.mxu0 0
    %2231 = vmatpush1.bf16.msra.mxu0 %v1798
    %2232 = vmatprep.subr.bf16.mxu0 0
    %2233 = vmatpush1.bf16.msra.mxu0 %v1791
    %2234 = vmatprep.subr.bf16.mxu0 0
    %2235 = vmatpush1.bf16.msra.mxu0 %v1784
    %2236 = vmatprep.subr.bf16.mxu0 0
    %2237 = vmatpush1.bf16.msra.mxu0 %v1777
    %2238 = vmatprep.subr.bf16.mxu0 0
    %2239 = vmatpush2.bf16.msra.mxu0 0
    %2240 = vmatprep.subr.bf16.mxu0 0
    %2241 = vmatpush2.bf16.msra.mxu0 0
    %2242 = vmatprep.subr.bf16.mxu0 0
    %2243 = vmatpush2.bf16.msra.mxu0 0
    %2244 = vmatprep.subr.bf16.mxu0 0
    %2245 = vmatpush2.bf16.msra.mxu0 0
    %2246 = vmatprep.subr.bf16.mxu0 0
    %2247 = vmatpush2.bf16.msra.mxu0 0
    %2248 = vmatprep.subr.bf16.mxu0 0
    %2249 = vmatpush2.bf16.msra.mxu0 0
    %2250 = vmatprep.subr.bf16.mxu0 0
    %2251 = vmatpush2.bf16.msra.mxu0 0
    %2252 = vmatprep.subr.bf16.mxu0 0
    %2253 = vmatpush2.bf16.msra.mxu0 0
    %2254 = vmatprep.mubr.bf16.mxu0 0
    %2255 = vmatmul.mubr.bf16.gmra.mxu0 %v1486
    %v2256 = vpop.f32.mrf.mxu0
    %v2257 = vadd.f32 %v1587, %v2256
    %v2258 = vpop.f32.mrf.mxu0
    %v2259 = vpop.f32.mrf.mxu0
    %v2260 = vadd.f32 %v1587, %v2259
    %v2261 = vpop.f32.mrf.mxu0
    %2262 = vmatprep.mubr.bf16.mxu0 0
    %2263 = vmatmul.mubr.bf16.gmra.mxu0 %v1487
    %v2264 = vpop.f32.mrf.mxu0
    %v2265 = vadd.f32 %v1587, %v2264
    %v2266 = vpop.f32.mrf.mxu0
    %v2267 = vpop.f32.mrf.mxu0
    %v2268 = vadd.f32 %v1587, %v2267
    %v2269 = vpop.f32.mrf.mxu0
    %2270 = vmatprep.mubr.bf16.mxu0 0
    %2271 = vmatmul.mubr.bf16.gmra.mxu0 %v1488
    %v2272 = vpop.f32.mrf.mxu0
    %v2273 = vadd.f32 %v1587, %v2272
    %v2274 = vpop.f32.mrf.mxu0
    %v2275 = vpop.f32.mrf.mxu0
    %v2276 = vadd.f32 %v1587, %v2275
    %v2277 = vpop.f32.mrf.mxu0
    %2278 = vmatprep.mubr.bf16.mxu0 0
    %2279 = vmatmul.mubr.bf16.gmra.mxu0 %v1489
    %v2280 = vpop.f32.mrf.mxu0
    %v2281 = vadd.f32 %v1587, %v2280
    %v2282 = vpop.f32.mrf.mxu0
    %v2283 = vpop.f32.mrf.mxu0
    %v2284 = vadd.f32 %v1587, %v2283
    %v2285 = vpop.f32.mrf.mxu0
    %2286 = vmatprep.mubr.bf16.mxu0 0
    %2287 = vmatmul.mubr.bf16.gmra.mxu0 %v1490
    %v2288 = vpop.f32.mrf.mxu0
    %v2289 = vadd.f32 %v1587, %v2288
    %v2290 = vpop.f32.mrf.mxu0
    %v2291 = vpop.f32.mrf.mxu0
    %v2292 = vadd.f32 %v1587, %v2291
    %v2293 = vpop.f32.mrf.mxu0
    %2294 = vmatprep.mubr.bf16.mxu0 0
    %2295 = vmatmul.mubr.bf16.gmra.mxu0 %v1491
    %v2296 = vpop.f32.mrf.mxu0
    %v2297 = vadd.f32 %v1587, %v2296
    %v2298 = vpop.f32.mrf.mxu0
    %v2299 = vpop.f32.mrf.mxu0
    %v2300 = vadd.f32 %v1587, %v2299
    %v2301 = vpop.f32.mrf.mxu0
    %2302 = vmatprep.mubr.bf16.mxu0 0
    %2303 = vmatmul.mubr.bf16.gmra.mxu0 %v1492
    %v2304 = vpop.f32.mrf.mxu0
    %v2305 = vadd.f32 %v1587, %v2304
    %v2306 = vpop.f32.mrf.mxu0
    %v2307 = vpop.f32.mrf.mxu0
    %v2308 = vadd.f32 %v1587, %v2307
    %v2309 = vpop.f32.mrf.mxu0
    %2310 = vmatprep.mubr.bf16.mxu0 0
    %2311 = vmatmul.mubr.bf16.gmra.mxu0 %v1493
    %v2312 = vpop.f32.mrf.mxu0
    %v2313 = vadd.f32 %v1587, %v2312
    %v2314 = vpop.f32.mrf.mxu0
    %v2315 = vpop.f32.mrf.mxu0
    %v2316 = vadd.f32 %v1587, %v2315
    %v2317 = vpop.f32.mrf.mxu0
    %2318 = vdwg.mxu0
    %v2319 = vxor.u32 %v1918, 2147483648
    %v2320 = vxor.u32 %v1920, 2147483648
    %v2321 = vxor.u32 %v2031, 2147483648
    %v2322 = vxor.u32 %v2033, 2147483648
    %v2323 = vxor.u32 %v2144, 2147483648
    %v2324 = vxor.u32 %v2146, 2147483648
    %v2325 = vxor.u32 %v2257, 2147483648
    %v2326 = vxor.u32 %v1922, 2147483648
    %v2327 = vxor.u32 %v1924, 2147483648
    %v2328 = vxor.u32 %v2035, 2147483648
    %v2329 = vxor.u32 %v2037, 2147483648
    %v2330 = vxor.u32 %v2148, 2147483648
    %v2331 = vxor.u32 %v2150, 2147483648
    %v2332 = vxor.u32 %v2260, 2147483648
    %v2333 = vxor.u32 %v1928, 2147483648
    %v2334 = vxor.u32 %v1930, 2147483648
    %v2335 = vxor.u32 %v2041, 2147483648
    %v2336 = vxor.u32 %v2043, 2147483648
    %v2337 = vxor.u32 %v2154, 2147483648
    %v2338 = vxor.u32 %v2156, 2147483648
    %v2339 = vxor.u32 %v2265, 2147483648
    %v2340 = vxor.u32 %v1932, 2147483648
    %v2341 = vxor.u32 %v1934, 2147483648
    %v2342 = vxor.u32 %v2045, 2147483648
    %v2343 = vxor.u32 %v2047, 2147483648
    %v2344 = vxor.u32 %v2158, 2147483648
    %v2345 = vxor.u32 %v2160, 2147483648
    %v2346 = vxor.u32 %v2268, 2147483648
    %v2347 = vxor.u32 %v1938, 2147483648
    %v2348 = vxor.u32 %v1940, 2147483648
    %v2349 = vxor.u32 %v2051, 2147483648
    %v2350 = vxor.u32 %v2053, 2147483648
    %v2351 = vxor.u32 %v2164, 2147483648
    %v2352 = vxor.u32 %v2166, 2147483648
    %v2353 = vxor.u32 %v2273, 2147483648
    %v2354 = vxor.u32 %v1942, 2147483648
    %v2355 = vxor.u32 %v1944, 2147483648
    %v2356 = vxor.u32 %v2055, 2147483648
    %v2357 = vxor.u32 %v2057, 2147483648
    %v2358 = vxor.u32 %v2168, 2147483648
    %v2359 = vxor.u32 %v2170, 2147483648
    %v2360 = vxor.u32 %v2276, 2147483648
    %v2361 = vxor.u32 %v1948, 2147483648
    %v2362 = vxor.u32 %v1950, 2147483648
    %v2363 = vxor.u32 %v2061, 2147483648
    %v2364 = vxor.u32 %v2063, 2147483648
    %v2365 = vxor.u32 %v2174, 2147483648
    %v2366 = vxor.u32 %v2176, 2147483648
    %v2367 = vxor.u32 %v2281, 2147483648
    %v2368 = vxor.u32 %v1952, 2147483648
    %v2369 = vxor.u32 %v1954, 2147483648
    %v2370 = vxor.u32 %v2065, 2147483648
    %v2371 = vxor.u32 %v2067, 2147483648
    %v2372 = vxor.u32 %v2178, 2147483648
    %v2373 = vxor.u32 %v2180, 2147483648
    %v2374 = vxor.u32 %v2284, 2147483648
    %v2375 = vxor.u32 %v1958, 2147483648
    %v2376 = vxor.u32 %v1960, 2147483648
    %v2377 = vxor.u32 %v2071, 2147483648
    %v2378 = vxor.u32 %v2073, 2147483648
    %v2379 = vxor.u32 %v2184, 2147483648
    %v2380 = vxor.u32 %v2186, 2147483648
    %v2381 = vxor.u32 %v2289, 2147483648
    %v2382 = vxor.u32 %v1962, 2147483648
    %v2383 = vxor.u32 %v1964, 2147483648
    %v2384 = vxor.u32 %v2075, 2147483648
    %v2385 = vxor.u32 %v2077, 2147483648
    %v2386 = vxor.u32 %v2188, 2147483648
    %v2387 = vxor.u32 %v2190, 2147483648
    %v2388 = vxor.u32 %v2292, 2147483648
    %v2389 = vxor.u32 %v1968, 2147483648
    %v2390 = vxor.u32 %v1970, 2147483648
    %v2391 = vxor.u32 %v2081, 2147483648
    %v2392 = vxor.u32 %v2083, 2147483648
    %v2393 = vxor.u32 %v2194, 2147483648
    %v2394 = vxor.u32 %v2196, 2147483648
    %v2395 = vxor.u32 %v2297, 2147483648
    %v2396 = vxor.u32 %v1972, 2147483648
    %v2397 = vxor.u32 %v1974, 2147483648
    %v2398 = vxor.u32 %v2085, 2147483648
    %v2399 = vxor.u32 %v2087, 2147483648
    %v2400 = vxor.u32 %v2198, 2147483648
    %v2401 = vxor.u32 %v2200, 2147483648
    %v2402 = vxor.u32 %v2300, 2147483648
    %v2403 = vxor.u32 %v1978, 2147483648
    %v2404 = vxor.u32 %v1980, 2147483648
    %v2405 = vxor.u32 %v2091, 2147483648
    %v2406 = vxor.u32 %v2093, 2147483648
    %v2407 = vxor.u32 %v2204, 2147483648
    %v2408 = vxor.u32 %v2206, 2147483648
    %v2409 = vxor.u32 %v2305, 2147483648
    %v2410 = vxor.u32 %v1982, 2147483648
    %v2411 = vxor.u32 %v1984, 2147483648
    %v2412 = vxor.u32 %v2095, 2147483648
    %v2413 = vxor.u32 %v2097, 2147483648
    %v2414 = vxor.u32 %v2208, 2147483648
    %v2415 = vxor.u32 %v2210, 2147483648
    %v2416 = vxor.u32 %v2308, 2147483648
    %v2417 = vxor.u32 %v1988, 2147483648
    %v2418 = vxor.u32 %v1990, 2147483648
    %v2419 = vxor.u32 %v2101, 2147483648
    %v2420 = vxor.u32 %v2103, 2147483648
    %v2421 = vxor.u32 %v2214, 2147483648
    %v2422 = vxor.u32 %v2216, 2147483648
    %v2423 = vxor.u32 %v2313, 2147483648
    %v2424 = vxor.u32 %v1992, 2147483648
    %v2425 = vxor.u32 %v1994, 2147483648
    %v2426 = vxor.u32 %v2105, 2147483648
    %v2427 = vxor.u32 %v2107, 2147483648
    %v2428 = vxor.u32 %v2218, 2147483648
    %v2429 = vxor.u32 %v2220, 2147483648
    %v2430 = vxor.u32 %v2316, 2147483648
    %v2431 = vmul.f32 %v2319, 1.442695
    %v2432 = vpow.pop %v2431
    %v2433 = vmul.f32 %v2320, 1.442695
    %v2434 = vpow.pop %v2433
    %v2435 = vmul.f32 %v2321, 1.442695
    %v2436 = vpow.pop %v2435
    %v2437 = vmul.f32 %v2322, 1.442695
    %v2438 = vpow.pop %v2437
    %v2439 = vmul.f32 %v2323, 1.442695
    %v2440 = vpow.pop %v2439
    %v2441 = vmul.f32 %v2324, 1.442695
    %v2442 = vpow.pop %v2441
    %v2443 = vmul.f32 %v2325, 1.442695
    %v2444 = vpow.pop %v2443
    %v2445 = vmul.f32 %v2326, 1.442695
    %v2446 = vpow.pop %v2445
    %v2447 = vmul.f32 %v2327, 1.442695
    %v2448 = vpow.pop %v2447
    %v2449 = vmul.f32 %v2328, 1.442695
    %v2450 = vpow.pop %v2449
    %v2451 = vmul.f32 %v2329, 1.442695
    %v2452 = vpow.pop %v2451
    %v2453 = vmul.f32 %v2330, 1.442695
    %v2454 = vpow.pop %v2453
    %v2455 = vmul.f32 %v2331, 1.442695
    %v2456 = vpow.pop %v2455
    %v2457 = vmul.f32 %v2332, 1.442695
    %v2458 = vpow.pop %v2457
    %v2459 = vmul.f32 %v2333, 1.442695
    %v2460 = vpow.pop %v2459
    %v2461 = vmul.f32 %v2334, 1.442695
    %v2462 = vpow.pop %v2461
    %v2463 = vmul.f32 %v2335, 1.442695
    %v2464 = vpow.pop %v2463
    %v2465 = vmul.f32 %v2336, 1.442695
    %v2466 = vpow.pop %v2465
    %v2467 = vmul.f32 %v2337, 1.442695
    %v2468 = vpow.pop %v2467
    %v2469 = vmul.f32 %v2338, 1.442695
    %v2470 = vpow.pop %v2469
    %v2471 = vmul.f32 %v2339, 1.442695
    %v2472 = vpow.pop %v2471
    %v2473 = vmul.f32 %v2340, 1.442695
    %v2474 = vpow.pop %v2473
    %v2475 = vmul.f32 %v2341, 1.442695
    %v2476 = vpow.pop %v2475
    %v2477 = vmul.f32 %v2342, 1.442695
    %v2478 = vpow.pop %v2477
    %v2479 = vmul.f32 %v2343, 1.442695
    %v2480 = vpow.pop %v2479
    %v2481 = vmul.f32 %v2344, 1.442695
    %v2482 = vpow.pop %v2481
    %v2483 = vmul.f32 %v2345, 1.442695
    %v2484 = vpow.pop %v2483
    %v2485 = vmul.f32 %v2346, 1.442695
    %v2486 = vpow.pop %v2485
    %v2487 = vmul.f32 %v2347, 1.442695
    %v2488 = vpow.pop %v2487
    %v2489 = vmul.f32 %v2348, 1.442695
    %v2490 = vpow.pop %v2489
    %v2491 = vmul.f32 %v2349, 1.442695
    %v2492 = vpow.pop %v2491
    %v2493 = vmul.f32 %v2350, 1.442695
    %v2494 = vpow.pop %v2493
    %v2495 = vmul.f32 %v2351, 1.442695
    %v2496 = vpow.pop %v2495
    %v2497 = vmul.f32 %v2352, 1.442695
    %v2498 = vpow.pop %v2497
    %v2499 = vmul.f32 %v2353, 1.442695
    %v2500 = vpow.pop %v2499
    %v2501 = vmul.f32 %v2354, 1.442695
    %v2502 = vpow.pop %v2501
    %v2503 = vmul.f32 %v2355, 1.442695
    %v2504 = vpow.pop %v2503
    %v2505 = vmul.f32 %v2356, 1.442695
    %v2506 = vpow.pop %v2505
    %v2507 = vmul.f32 %v2357, 1.442695
    %v2508 = vpow.pop %v2507
    %v2509 = vmul.f32 %v2358, 1.442695
    %v2510 = vpow.pop %v2509
    %v2511 = vmul.f32 %v2359, 1.442695
    %v2512 = vpow.pop %v2511
    %v2513 = vmul.f32 %v2360, 1.442695
    %v2514 = vpow.pop %v2513
    %v2515 = vmul.f32 %v2361, 1.442695
    %v2516 = vpow.pop %v2515
    %v2517 = vmul.f32 %v2362, 1.442695
    %v2518 = vpow.pop %v2517
    %v2519 = vmul.f32 %v2363, 1.442695
    %v2520 = vpow.pop %v2519
    %v2521 = vmul.f32 %v2364, 1.442695
    %v2522 = vpow.pop %v2521
    %v2523 = vmul.f32 %v2365, 1.442695
    %v2524 = vpow.pop %v2523
    %v2525 = vmul.f32 %v2366, 1.442695
    %v2526 = vpow.pop %v2525
    %v2527 = vmul.f32 %v2367, 1.442695
    %v2528 = vpow.pop %v2527
    %v2529 = vmul.f32 %v2368, 1.442695
    %v2530 = vpow.pop %v2529
    %v2531 = vmul.f32 %v2369, 1.442695
    %v2532 = vpow.pop %v2531
    %v2533 = vmul.f32 %v2370, 1.442695
    %v2534 = vpow.pop %v2533
    %v2535 = vmul.f32 %v2371, 1.442695
    %v2536 = vpow.pop %v2535
    %v2537 = vmul.f32 %v2372, 1.442695
    %v2538 = vpow.pop %v2537
    %v2539 = vmul.f32 %v2373, 1.442695
    %v2540 = vpow.pop %v2539
    %v2541 = vmul.f32 %v2374, 1.442695
    %v2542 = vpow.pop %v2541
    %v2543 = vmul.f32 %v2375, 1.442695
    %v2544 = vpow.pop %v2543
    %v2545 = vmul.f32 %v2376, 1.442695
    %v2546 = vpow.pop %v2545
    %v2547 = vmul.f32 %v2377, 1.442695
    %v2548 = vpow.pop %v2547
    %v2549 = vmul.f32 %v2378, 1.442695
    %v2550 = vpow.pop %v2549
    %v2551 = vmul.f32 %v2379, 1.442695
    %v2552 = vpow.pop %v2551
    %v2553 = vmul.f32 %v2380, 1.442695
    %v2554 = vpow.pop %v2553
    %v2555 = vmul.f32 %v2381, 1.442695
    %v2556 = vpow.pop %v2555
    %v2557 = vmul.f32 %v2382, 1.442695
    %v2558 = vpow.pop %v2557
    %v2559 = vmul.f32 %v2383, 1.442695
    %v2560 = vpow.pop %v2559
    %v2561 = vmul.f32 %v2384, 1.442695
    %v2562 = vpow.pop %v2561
    %v2563 = vmul.f32 %v2385, 1.442695
    %v2564 = vpow.pop %v2563
    %v2565 = vmul.f32 %v2386, 1.442695
    %v2566 = vpow.pop %v2565
    %v2567 = vmul.f32 %v2387, 1.442695
    %v2568 = vpow.pop %v2567
    %v2569 = vmul.f32 %v2388, 1.442695
    %v2570 = vpow.pop %v2569
    %v2571 = vmul.f32 %v2389, 1.442695
    %v2572 = vpow.pop %v2571
    %v2573 = vmul.f32 %v2390, 1.442695
    %v2574 = vpow.pop %v2573
    %v2575 = vmul.f32 %v2391, 1.442695
    %v2576 = vpow.pop %v2575
    %v2577 = vmul.f32 %v2392, 1.442695
    %v2578 = vpow.pop %v2577
    %v2579 = vmul.f32 %v2393, 1.442695
    %v2580 = vpow.pop %v2579
    %v2581 = vmul.f32 %v2394, 1.442695
    %v2582 = vpow.pop %v2581
    %v2583 = vmul.f32 %v2395, 1.442695
    %v2584 = vpow.pop %v2583
    %v2585 = vmul.f32 %v2396, 1.442695
    %v2586 = vpow.pop %v2585
    %v2587 = vmul.f32 %v2397, 1.442695
    %v2588 = vpow.pop %v2587
    %v2589 = vmul.f32 %v2398, 1.442695
    %v2590 = vpow.pop %v2589
    %v2591 = vmul.f32 %v2399, 1.442695
    %v2592 = vpow.pop %v2591
    %v2593 = vmul.f32 %v2400, 1.442695
    %v2594 = vpow.pop %v2593
    %v2595 = vmul.f32 %v2401, 1.442695
    %v2596 = vpow.pop %v2595
    %v2597 = vmul.f32 %v2402, 1.442695
    %v2598 = vpow.pop %v2597
    %v2599 = vmul.f32 %v2403, 1.442695
    %v2600 = vpow.pop %v2599
    %v2601 = vmul.f32 %v2404, 1.442695
    %v2602 = vpow.pop %v2601
    %v2603 = vmul.f32 %v2405, 1.442695
    %v2604 = vpow.pop %v2603
    %v2605 = vmul.f32 %v2406, 1.442695
    %v2606 = vpow.pop %v2605
    %v2607 = vmul.f32 %v2407, 1.442695
    %v2608 = vpow.pop %v2607
    %v2609 = vmul.f32 %v2408, 1.442695
    %v2610 = vpow.pop %v2609
    %v2611 = vmul.f32 %v2409, 1.442695
    %v2612 = vpow.pop %v2611
    %v2613 = vmul.f32 %v2410, 1.442695
    %v2614 = vpow.pop %v2613
    %v2615 = vmul.f32 %v2411, 1.442695
    %v2616 = vpow.pop %v2615
    %v2617 = vmul.f32 %v2412, 1.442695
    %v2618 = vpow.pop %v2617
    %v2619 = vmul.f32 %v2413, 1.442695
    %v2620 = vpow.pop %v2619
    %v2621 = vmul.f32 %v2414, 1.442695
    %v2622 = vpow.pop %v2621
    %v2623 = vmul.f32 %v2415, 1.442695
    %v2624 = vpow.pop %v2623
    %v2625 = vmul.f32 %v2416, 1.442695
    %v2626 = vpow.pop %v2625
    %v2627 = vmul.f32 %v2417, 1.442695
    %v2628 = vpow.pop %v2627
    %v2629 = vmul.f32 %v2418, 1.442695
    %v2630 = vpow.pop %v2629
    %v2631 = vmul.f32 %v2419, 1.442695
    %v2632 = vpow.pop %v2631
    %v2633 = vmul.f32 %v2420, 1.442695
    %v2634 = vpow.pop %v2633
    %v2635 = vmul.f32 %v2421, 1.442695
    %v2636 = vpow.pop %v2635
    %v2637 = vmul.f32 %v2422, 1.442695
    %v2638 = vpow.pop %v2637
    %v2639 = vmul.f32 %v2423, 1.442695
    %v2640 = vpow.pop %v2639
    %v2641 = vmul.f32 %v2424, 1.442695
    %v2642 = vpow.pop %v2641
    %v2643 = vmul.f32 %v2425, 1.442695
    %v2644 = vpow.pop %v2643
    %v2645 = vmul.f32 %v2426, 1.442695
    %v2646 = vpow.pop %v2645
    %v2647 = vmul.f32 %v2427, 1.442695
    %v2648 = vpow.pop %v2647
    %v2649 = vmul.f32 %v2428, 1.442695
    %v2650 = vpow.pop %v2649
    %v2651 = vmul.f32 %v2429, 1.442695
    %v2652 = vpow.pop %v2651
    %v2653 = vmul.f32 %v2430, 1.442695
    %v2654 = vpow.pop %v2653
    %v2655 = vadd.f32 %v2432, 1.0
    %v2656 = vadd.f32 %v2434, 1.0
    %v2657 = vadd.f32 %v2436, 1.0
    %v2658 = vadd.f32 %v2438, 1.0
    %v2659 = vadd.f32 %v2440, 1.0
    %v2660 = vadd.f32 %v2442, 1.0
    %v2661 = vadd.f32 %v2444, 1.0
    %v2662 = vadd.f32 %v2446, 1.0
    %v2663 = vadd.f32 %v2448, 1.0
    %v2664 = vadd.f32 %v2450, 1.0
    %v2665 = vadd.f32 %v2452, 1.0
    %v2666 = vadd.f32 %v2454, 1.0
    %v2667 = vadd.f32 %v2456, 1.0
    %v2668 = vadd.f32 %v2458, 1.0
    %v2669 = vadd.f32 %v2460, 1.0
    %v2670 = vadd.f32 %v2462, 1.0
    %v2671 = vadd.f32 %v2464, 1.0
    %v2672 = vadd.f32 %v2466, 1.0
    %v2673 = vadd.f32 %v2468, 1.0
    %v2674 = vadd.f32 %v2470, 1.0
    %v2675 = vadd.f32 %v2472, 1.0
    %v2676 = vadd.f32 %v2474, 1.0
    %v2677 = vadd.f32 %v2476, 1.0
    %v2678 = vadd.f32 %v2478, 1.0
    %v2679 = vadd.f32 %v2480, 1.0
    %v2680 = vadd.f32 %v2482, 1.0
    %v2681 = vadd.f32 %v2484, 1.0
    %v2682 = vadd.f32 %v2486, 1.0
    %v2683 = vadd.f32 %v2488, 1.0
    %v2684 = vadd.f32 %v2490, 1.0
    %v2685 = vadd.f32 %v2492, 1.0
    %v2686 = vadd.f32 %v2494, 1.0
    %v2687 = vadd.f32 %v2496, 1.0
    %v2688 = vadd.f32 %v2498, 1.0
    %v2689 = vadd.f32 %v2500, 1.0
    %v2690 = vadd.f32 %v2502, 1.0
    %v2691 = vadd.f32 %v2504, 1.0
    %v2692 = vadd.f32 %v2506, 1.0
    %v2693 = vadd.f32 %v2508, 1.0
    %v2694 = vadd.f32 %v2510, 1.0
    %v2695 = vadd.f32 %v2512, 1.0
    %v2696 = vadd.f32 %v2514, 1.0
    %v2697 = vadd.f32 %v2516, 1.0
    %v2698 = vadd.f32 %v2518, 1.0
    %v2699 = vadd.f32 %v2520, 1.0
    %v2700 = vadd.f32 %v2522, 1.0
    %v2701 = vadd.f32 %v2524, 1.0
    %v2702 = vadd.f32 %v2526, 1.0
    %v2703 = vadd.f32 %v2528, 1.0
    %v2704 = vadd.f32 %v2530, 1.0
    %v2705 = vadd.f32 %v2532, 1.0
    %v2706 = vadd.f32 %v2534, 1.0
    %v2707 = vadd.f32 %v2536, 1.0
    %v2708 = vadd.f32 %v2538, 1.0
    %v2709 = vadd.f32 %v2540, 1.0
    %v2710 = vadd.f32 %v2542, 1.0
    %v2711 = vadd.f32 %v2544, 1.0
    %v2712 = vadd.f32 %v2546, 1.0
    %v2713 = vadd.f32 %v2548, 1.0
    %v2714 = vadd.f32 %v2550, 1.0
    %v2715 = vadd.f32 %v2552, 1.0
    %v2716 = vadd.f32 %v2554, 1.0
    %v2717 = vadd.f32 %v2556, 1.0
    %v2718 = vadd.f32 %v2558, 1.0
    %v2719 = vadd.f32 %v2560, 1.0
    %v2720 = vadd.f32 %v2562, 1.0
    %v2721 = vadd.f32 %v2564, 1.0
    %v2722 = vadd.f32 %v2566, 1.0
    %v2723 = vadd.f32 %v2568, 1.0
    %v2724 = vadd.f32 %v2570, 1.0
    %v2725 = vadd.f32 %v2572, 1.0
    %v2726 = vadd.f32 %v2574, 1.0
    %v2727 = vadd.f32 %v2576, 1.0
    %v2728 = vadd.f32 %v2578, 1.0
    %v2729 = vadd.f32 %v2580, 1.0
    %v2730 = vadd.f32 %v2582, 1.0
    %v2731 = vadd.f32 %v2584, 1.0
    %v2732 = vadd.f32 %v2586, 1.0
    %v2733 = vadd.f32 %v2588, 1.0
    %v2734 = vadd.f32 %v2590, 1.0
    %v2735 = vadd.f32 %v2592, 1.0
    %v2736 = vadd.f32 %v2594, 1.0
    %v2737 = vadd.f32 %v2596, 1.0
    %v2738 = vadd.f32 %v2598, 1.0
    %v2739 = vadd.f32 %v2600, 1.0
    %v2740 = vadd.f32 %v2602, 1.0
    %v2741 = vadd.f32 %v2604, 1.0
    %v2742 = vadd.f32 %v2606, 1.0
    %v2743 = vadd.f32 %v2608, 1.0
    %v2744 = vadd.f32 %v2610, 1.0
    %v2745 = vadd.f32 %v2612, 1.0
    %v2746 = vadd.f32 %v2614, 1.0
    %v2747 = vadd.f32 %v2616, 1.0
    %v2748 = vadd.f32 %v2618, 1.0
    %v2749 = vadd.f32 %v2620, 1.0
    %v2750 = vadd.f32 %v2622, 1.0
    %v2751 = vadd.f32 %v2624, 1.0
    %v2752 = vadd.f32 %v2626, 1.0
    %v2753 = vadd.f32 %v2628, 1.0
    %v2754 = vadd.f32 %v2630, 1.0
    %v2755 = vadd.f32 %v2632, 1.0
    %v2756 = vadd.f32 %v2634, 1.0
    %v2757 = vadd.f32 %v2636, 1.0
    %v2758 = vadd.f32 %v2638, 1.0
    %v2759 = vadd.f32 %v2640, 1.0
    %v2760 = vadd.f32 %v2642, 1.0
    %v2761 = vadd.f32 %v2644, 1.0
    %v2762 = vadd.f32 %v2646, 1.0
    %v2763 = vadd.f32 %v2648, 1.0
    %v2764 = vadd.f32 %v2650, 1.0
    %v2765 = vadd.f32 %v2652, 1.0
    %v2766 = vadd.f32 %v2654, 1.0
    %v2767 = vrcp.pop %v2655
    %v2768 = vmul.f32 1.0, %v2767
    %v2769 = vrcp.pop %v2656
    %v2770 = vmul.f32 1.0, %v2769
    %v2771 = vrcp.pop %v2657
    %v2772 = vmul.f32 1.0, %v2771
    %v2773 = vrcp.pop %v2658
    %v2774 = vmul.f32 1.0, %v2773
    %v2775 = vrcp.pop %v2659
    %v2776 = vmul.f32 1.0, %v2775
    %v2777 = vrcp.pop %v2660
    %v2778 = vmul.f32 1.0, %v2777
    %v2779 = vrcp.pop %v2661
    %v2780 = vmul.f32 1.0, %v2779
    %v2781 = vrcp.pop %v2662
    %v2782 = vmul.f32 1.0, %v2781
    %v2783 = vrcp.pop %v2663
    %v2784 = vmul.f32 1.0, %v2783
    %v2785 = vrcp.pop %v2664
    %v2786 = vmul.f32 1.0, %v2785
    %v2787 = vrcp.pop %v2665
    %v2788 = vmul.f32 1.0, %v2787
    %v2789 = vrcp.pop %v2666
    %v2790 = vmul.f32 1.0, %v2789
    %v2791 = vrcp.pop %v2667
    %v2792 = vmul.f32 1.0, %v2791
    %v2793 = vrcp.pop %v2668
    %v2794 = vmul.f32 1.0, %v2793
    %v2795 = vrcp.pop %v2669
    %v2796 = vmul.f32 1.0, %v2795
    %v2797 = vrcp.pop %v2670
    %v2798 = vmul.f32 1.0, %v2797
    %v2799 = vrcp.pop %v2671
    %v2800 = vmul.f32 1.0, %v2799
    %v2801 = vrcp.pop %v2672
    %v2802 = vmul.f32 1.0, %v2801
    %v2803 = vrcp.pop %v2673
    %v2804 = vmul.f32 1.0, %v2803
    %v2805 = vrcp.pop %v2674
    %v2806 = vmul.f32 1.0, %v2805
    %v2807 = vrcp.pop %v2675
    %v2808 = vmul.f32 1.0, %v2807
    %v2809 = vrcp.pop %v2676
    %v2810 = vmul.f32 1.0, %v2809
    %v2811 = vrcp.pop %v2677
    %v2812 = vmul.f32 1.0, %v2811
    %v2813 = vrcp.pop %v2678
    %v2814 = vmul.f32 1.0, %v2813
    %v2815 = vrcp.pop %v2679
    %v2816 = vmul.f32 1.0, %v2815
    %v2817 = vrcp.pop %v2680
    %v2818 = vmul.f32 1.0, %v2817
    %v2819 = vrcp.pop %v2681
    %v2820 = vmul.f32 1.0, %v2819
    %v2821 = vrcp.pop %v2682
    %v2822 = vmul.f32 1.0, %v2821
    %v2823 = vrcp.pop %v2683
    %v2824 = vmul.f32 1.0, %v2823
    %v2825 = vrcp.pop %v2684
    %v2826 = vmul.f32 1.0, %v2825
    %v2827 = vrcp.pop %v2685
    %v2828 = vmul.f32 1.0, %v2827
    %v2829 = vrcp.pop %v2686
    %v2830 = vmul.f32 1.0, %v2829
    %v2831 = vrcp.pop %v2687
    %v2832 = vmul.f32 1.0, %v2831
    %v2833 = vrcp.pop %v2688
    %v2834 = vmul.f32 1.0, %v2833
    %v2835 = vrcp.pop %v2689
    %v2836 = vmul.f32 1.0, %v2835
    %v2837 = vrcp.pop %v2690
    %v2838 = vmul.f32 1.0, %v2837
    %v2839 = vrcp.pop %v2691
    %v2840 = vmul.f32 1.0, %v2839
    %v2841 = vrcp.pop %v2692
    %v2842 = vmul.f32 1.0, %v2841
    %v2843 = vrcp.pop %v2693
    %v2844 = vmul.f32 1.0, %v2843
    %v2845 = vrcp.pop %v2694
    %v2846 = vmul.f32 1.0, %v2845
    %v2847 = vrcp.pop %v2695
    %v2848 = vmul.f32 1.0, %v2847
    %v2849 = vrcp.pop %v2696
    %v2850 = vmul.f32 1.0, %v2849
    %v2851 = vrcp.pop %v2697
    %v2852 = vmul.f32 1.0, %v2851
    %v2853 = vrcp.pop %v2698
    %v2854 = vmul.f32 1.0, %v2853
    %v2855 = vrcp.pop %v2699
    %v2856 = vmul.f32 1.0, %v2855
    %v2857 = vrcp.pop %v2700
    %v2858 = vmul.f32 1.0, %v2857
    %v2859 = vrcp.pop %v2701
    %v2860 = vmul.f32 1.0, %v2859
    %v2861 = vrcp.pop %v2702
    %v2862 = vmul.f32 1.0, %v2861
    %v2863 = vrcp.pop %v2703
    %v2864 = vmul.f32 1.0, %v2863
    %v2865 = vrcp.pop %v2704
    %v2866 = vmul.f32 1.0, %v2865
    %v2867 = vrcp.pop %v2705
    %v2868 = vmul.f32 1.0, %v2867
    %v2869 = vrcp.pop %v2706
    %v2870 = vmul.f32 1.0, %v2869
    %v2871 = vrcp.pop %v2707
    %v2872 = vmul.f32 1.0, %v2871
    %v2873 = vrcp.pop %v2708
    %v2874 = vmul.f32 1.0, %v2873
    %v2875 = vrcp.pop %v2709
    %v2876 = vmul.f32 1.0, %v2875
    %v2877 = vrcp.pop %v2710
    %v2878 = vmul.f32 1.0, %v2877
    %v2879 = vrcp.pop %v2711
    %v2880 = vmul.f32 1.0, %v2879
    %v2881 = vrcp.pop %v2712
    %v2882 = vmul.f32 1.0, %v2881
    %v2883 = vrcp.pop %v2713
    %v2884 = vmul.f32 1.0, %v2883
    %v2885 = vrcp.pop %v2714
    %v2886 = vmul.f32 1.0, %v2885
    %v2887 = vrcp.pop %v2715
    %v2888 = vmul.f32 1.0, %v2887
    %v2889 = vrcp.pop %v2716
    %v2890 = vmul.f32 1.0, %v2889
    %v2891 = vrcp.pop %v2717
    %v2892 = vmul.f32 1.0, %v2891
    %v2893 = vrcp.pop %v2718
    %v2894 = vmul.f32 1.0, %v2893
    %v2895 = vrcp.pop %v2719
    %v2896 = vmul.f32 1.0, %v2895
    %v2897 = vrcp.pop %v2720
    %v2898 = vmul.f32 1.0, %v2897
    %v2899 = vrcp.pop %v2721
    %v2900 = vmul.f32 1.0, %v2899
    %v2901 = vrcp.pop %v2722
    %v2902 = vmul.f32 1.0, %v2901
    %v2903 = vrcp.pop %v2723
    %v2904 = vmul.f32 1.0, %v2903
    %v2905 = vrcp.pop %v2724
    %v2906 = vmul.f32 1.0, %v2905
    %v2907 = vrcp.pop %v2725
    %v2908 = vmul.f32 1.0, %v2907
    %v2909 = vrcp.pop %v2726
    %v2910 = vmul.f32 1.0, %v2909
    %v2911 = vrcp.pop %v2727
    %v2912 = vmul.f32 1.0, %v2911
    %v2913 = vrcp.pop %v2728
    %v2914 = vmul.f32 1.0, %v2913
    %v2915 = vrcp.pop %v2729
    %v2916 = vmul.f32 1.0, %v2915
    %v2917 = vrcp.pop %v2730
    %v2918 = vmul.f32 1.0, %v2917
    %v2919 = vrcp.pop %v2731
    %v2920 = vmul.f32 1.0, %v2919
    %v2921 = vrcp.pop %v2732
    %v2922 = vmul.f32 1.0, %v2921
    %v2923 = vrcp.pop %v2733
    %v2924 = vmul.f32 1.0, %v2923
    %v2925 = vrcp.pop %v2734
    %v2926 = vmul.f32 1.0, %v2925
    %v2927 = vrcp.pop %v2735
    %v2928 = vmul.f32 1.0, %v2927
    %v2929 = vrcp.pop %v2736
    %v2930 = vmul.f32 1.0, %v2929
    %v2931 = vrcp.pop %v2737
    %v2932 = vmul.f32 1.0, %v2931
    %v2933 = vrcp.pop %v2738
    %v2934 = vmul.f32 1.0, %v2933
    %v2935 = vrcp.pop %v2739
    %v2936 = vmul.f32 1.0, %v2935
    %v2937 = vrcp.pop %v2740
    %v2938 = vmul.f32 1.0, %v2937
    %v2939 = vrcp.pop %v2741
    %v2940 = vmul.f32 1.0, %v2939
    %v2941 = vrcp.pop %v2742
    %v2942 = vmul.f32 1.0, %v2941
    %v2943 = vrcp.pop %v2743
    %v2944 = vmul.f32 1.0, %v2943
    %v2945 = vrcp.pop %v2744
    %v2946 = vmul.f32 1.0, %v2945
    %v2947 = vrcp.pop %v2745
    %v2948 = vmul.f32 1.0, %v2947
    %v2949 = vrcp.pop %v2746
    %v2950 = vmul.f32 1.0, %v2949
    %v2951 = vrcp.pop %v2747
    %v2952 = vmul.f32 1.0, %v2951
    %v2953 = vrcp.pop %v2748
    %v2954 = vmul.f32 1.0, %v2953
    %v2955 = vrcp.pop %v2749
    %v2956 = vmul.f32 1.0, %v2955
    %v2957 = vrcp.pop %v2750
    %v2958 = vmul.f32 1.0, %v2957
    %v2959 = vrcp.pop %v2751
    %v2960 = vmul.f32 1.0, %v2959
    %v2961 = vrcp.pop %v2752
    %v2962 = vmul.f32 1.0, %v2961
    %v2963 = vrcp.pop %v2753
    %v2964 = vmul.f32 1.0, %v2963
    %v2965 = vrcp.pop %v2754
    %v2966 = vmul.f32 1.0, %v2965
    %v2967 = vrcp.pop %v2755
    %v2968 = vmul.f32 1.0, %v2967
    %v2969 = vrcp.pop %v2756
    %v2970 = vmul.f32 1.0, %v2969
    %v2971 = vrcp.pop %v2757
    %v2972 = vmul.f32 1.0, %v2971
    %v2973 = vrcp.pop %v2758
    %v2974 = vmul.f32 1.0, %v2973
    %v2975 = vrcp.pop %v2759
    %v2976 = vmul.f32 1.0, %v2975
    %v2977 = vrcp.pop %v2760
    %v2978 = vmul.f32 1.0, %v2977
    %v2979 = vrcp.pop %v2761
    %v2980 = vmul.f32 1.0, %v2979
    %v2981 = vrcp.pop %v2762
    %v2982 = vmul.f32 1.0, %v2981
    %v2983 = vrcp.pop %v2763
    %v2984 = vmul.f32 1.0, %v2983
    %v2985 = vrcp.pop %v2764
    %v2986 = vmul.f32 1.0, %v2985
    %v2987 = vrcp.pop %v2765
    %v2988 = vmul.f32 1.0, %v2987
    %v2989 = vrcp.pop %v2766
    %v2990 = vmul.f32 1.0, %v2989
    %2991 = vst [vmem:[#allocation10] sm:$0xff] %v2768
    %2992 = vst [vmem:[#allocation10 + $0x8] sm:$0xff] %v2770
    %2993 = vst [vmem:[#allocation10 + $0x10] sm:$0xff] %v2772
    %2994 = vst [vmem:[#allocation10 + $0x18] sm:$0xff] %v2774
    %2995 = vst [vmem:[#allocation10 + $0x20] sm:$0xff] %v2776
    %2996 = vst [vmem:[#allocation10 + $0x28] sm:$0xff] %v2778
    %2997 = vst [vmem:[#allocation10 + $0x30] sm:$0xff] %v2780
    %2998 = vst [vmem:[#allocation10 + $0x38] sm:$0xff] %v2782
    %2999 = vst [vmem:[#allocation10 + $0x40] sm:$0xff] %v2784
    %3000 = vst [vmem:[#allocation10 + $0x48] sm:$0xff] %v2786
    %3001 = vst [vmem:[#allocation10 + $0x50] sm:$0xff] %v2788
    %3002 = vst [vmem:[#allocation10 + $0x58] sm:$0xff] %v2790
    %3003 = vst [vmem:[#allocation10 + $0x60] sm:$0xff] %v2792
    %3004 = vst [vmem:[#allocation10 + $0x68] sm:$0xff] %v2794
    %3005 = vst [vmem:[#allocation10 + $0x70] sm:$0xff] %v2796
    %3006 = vst [vmem:[#allocation10 + $0x78] sm:$0xff] %v2798
    %3007 = vst [vmem:[#allocation10 + $0x80] sm:$0xff] %v2800
    %3008 = vst [vmem:[#allocation10 + $0x88] sm:$0xff] %v2802
    %3009 = vst [vmem:[#allocation10 + $0x90] sm:$0xff] %v2804
    %3010 = vst [vmem:[#allocation10 + $0x98] sm:$0xff] %v2806
    %3011 = vst [vmem:[#allocation10 + $0xa0] sm:$0xff] %v2808
    %3012 = vst [vmem:[#allocation10 + $0xa8] sm:$0xff] %v2810
    %3013 = vst [vmem:[#allocation10 + $0xb0] sm:$0xff] %v2812
    %3014 = vst [vmem:[#allocation10 + $0xb8] sm:$0xff] %v2814
    %3015 = vst [vmem:[#allocation10 + $0xc0] sm:$0xff] %v2816
    %3016 = vst [vmem:[#allocation10 + $0xc8] sm:$0xff] %v2818
    %3017 = vst [vmem:[#allocation10 + $0xd0] sm:$0xff] %v2820
    %3018 = vst [vmem:[#allocation10 + $0xd8] sm:$0xff] %v2822
    %3019 = vst [vmem:[#allocation10 + $0xe0] sm:$0xff] %v2824
    %3020 = vst [vmem:[#allocation10 + $0xe8] sm:$0xff] %v2826
    %3021 = vst [vmem:[#allocation10 + $0xf0] sm:$0xff] %v2828
    %3022 = vst [vmem:[#allocation10 + $0xf8] sm:$0xff] %v2830
    %3023 = vst [vmem:[#allocation10 + $0x100] sm:$0xff] %v2832
    %3024 = vst [vmem:[#allocation10 + $0x108] sm:$0xff] %v2834
    %3025 = vst [vmem:[#allocation10 + $0x110] sm:$0xff] %v2836
    %3026 = vst [vmem:[#allocation10 + $0x118] sm:$0xff] %v2838
    %3027 = vst [vmem:[#allocation10 + $0x120] sm:$0xff] %v2840
    %3028 = vst [vmem:[#allocation10 + $0x128] sm:$0xff] %v2842
    %3029 = vst [vmem:[#allocation10 + $0x130] sm:$0xff] %v2844
    %3030 = vst [vmem:[#allocation10 + $0x138] sm:$0xff] %v2846
    %3031 = vst [vmem:[#allocation10 + $0x140] sm:$0xff] %v2848
    %3032 = vst [vmem:[#allocation10 + $0x148] sm:$0xff] %v2850
    %3033 = vst [vmem:[#allocation10 + $0x150] sm:$0xff] %v2852
    %3034 = vst [vmem:[#allocation10 + $0x158] sm:$0xff] %v2854
    %3035 = vst [vmem:[#allocation10 + $0x160] sm:$0xff] %v2856
    %3036 = vst [vmem:[#allocation10 + $0x168] sm:$0xff] %v2858
    %3037 = vst [vmem:[#allocation10 + $0x170] sm:$0xff] %v2860
    %3038 = vst [vmem:[#allocation10 + $0x178] sm:$0xff] %v2862
    %3039 = vst [vmem:[#allocation10 + $0x180] sm:$0xff] %v2864
    %3040 = vst [vmem:[#allocation10 + $0x188] sm:$0xff] %v2866
    %3041 = vst [vmem:[#allocation10 + $0x190] sm:$0xff] %v2868
    %3042 = vst [vmem:[#allocation10 + $0x198] sm:$0xff] %v2870
    %3043 = vst [vmem:[#allocation10 + $0x1a0] sm:$0xff] %v2872
    %3044 = vst [vmem:[#allocation10 + $0x1a8] sm:$0xff] %v2874
    %3045 = vst [vmem:[#allocation10 + $0x1b0] sm:$0xff] %v2876
    %3046 = vst [vmem:[#allocation10 + $0x1b8] sm:$0xff] %v2878
    %3047 = vst [vmem:[#allocation10 + $0x1c0] sm:$0xff] %v2880
    %3048 = vst [vmem:[#allocation10 + $0x1c8] sm:$0xff] %v2882
    %3049 = vst [vmem:[#allocation10 + $0x1d0] sm:$0xff] %v2884
    %3050 = vst [vmem:[#allocation10 + $0x1d8] sm:$0xff] %v2886
    %3051 = vst [vmem:[#allocation10 + $0x1e0] sm:$0xff] %v2888
    %3052 = vst [vmem:[#allocation10 + $0x1e8] sm:$0xff] %v2890
    %3053 = vst [vmem:[#allocation10 + $0x1f0] sm:$0xff] %v2892
    %3054 = vst [vmem:[#allocation10 + $0x1f8] sm:$0xff] %v2894
    %3055 = vst [vmem:[#allocation10 + $0x200] sm:$0xff] %v2896
    %3056 = vst [vmem:[#allocation10 + $0x208] sm:$0xff] %v2898
    %3057 = vst [vmem:[#allocation10 + $0x210] sm:$0xff] %v2900
    %3058 = vst [vmem:[#allocation10 + $0x218] sm:$0xff] %v2902
    %3059 = vst [vmem:[#allocation10 + $0x220] sm:$0xff] %v2904
    %3060 = vst [vmem:[#allocation10 + $0x228] sm:$0xff] %v2906
    %3061 = vst [vmem:[#allocation10 + $0x230] sm:$0xff] %v2908
    %3062 = vst [vmem:[#allocation10 + $0x238] sm:$0xff] %v2910
    %3063 = vst [vmem:[#allocation10 + $0x240] sm:$0xff] %v2912
    %3064 = vst [vmem:[#allocation10 + $0x248] sm:$0xff] %v2914
    %3065 = vst [vmem:[#allocation10 + $0x250] sm:$0xff] %v2916
    %3066 = vst [vmem:[#allocation10 + $0x258] sm:$0xff] %v2918
    %3067 = vst [vmem:[#allocation10 + $0x260] sm:$0xff] %v2920
    %3068 = vst [vmem:[#allocation10 + $0x268] sm:$0xff] %v2922
    %3069 = vst [vmem:[#allocation10 + $0x270] sm:$0xff] %v2924
    %3070 = vst [vmem:[#allocation10 + $0x278] sm:$0xff] %v2926
    %3071 = vst [vmem:[#allocation10 + $0x280] sm:$0xff] %v2928
    %3072 = vst [vmem:[#allocation10 + $0x288] sm:$0xff] %v2930
    %3073 = vst [vmem:[#allocation10 + $0x290] sm:$0xff] %v2932
    %3074 = vst [vmem:[#allocation10 + $0x298] sm:$0xff] %v2934
    %3075 = vst [vmem:[#allocation10 + $0x2a0] sm:$0xff] %v2936
    %3076 = vst [vmem:[#allocation10 + $0x2a8] sm:$0xff] %v2938
    %3077 = vst [vmem:[#allocation10 + $0x2b0] sm:$0xff] %v2940
    %3078 = vst [vmem:[#allocation10 + $0x2b8] sm:$0xff] %v2942
    %3079 = vst [vmem:[#allocation10 + $0x2c0] sm:$0xff] %v2944
    %3080 = vst [vmem:[#allocation10 + $0x2c8] sm:$0xff] %v2946
    %3081 = vst [vmem:[#allocation10 + $0x2d0] sm:$0xff] %v2948
    %3082 = vst [vmem:[#allocation10 + $0x2d8] sm:$0xff] %v2950
    %3083 = vst [vmem:[#allocation10 + $0x2e0] sm:$0xff] %v2952
    %3084 = vst [vmem:[#allocation10 + $0x2e8] sm:$0xff] %v2954
    %3085 = vst [vmem:[#allocation10 + $0x2f0] sm:$0xff] %v2956
    %3086 = vst [vmem:[#allocation10 + $0x2f8] sm:$0xff] %v2958
    %3087 = vst [vmem:[#allocation10 + $0x300] sm:$0xff] %v2960
    %3088 = vst [vmem:[#allocation10 + $0x308] sm:$0xff] %v2962
    %3089 = vst [vmem:[#allocation10 + $0x310] sm:$0xff] %v2964
    %3090 = vst [vmem:[#allocation10 + $0x318] sm:$0xff] %v2966
    %3091 = vst [vmem:[#allocation10 + $0x320] sm:$0xff] %v2968
    %3092 = vst [vmem:[#allocation10 + $0x328] sm:$0xff] %v2970
    %3093 = vst [vmem:[#allocation10 + $0x330] sm:$0xff] %v2972
    %3094 = vst [vmem:[#allocation10 + $0x338] sm:$0xff] %v2974
    %3095 = vst [vmem:[#allocation10 + $0x340] sm:$0xff] %v2976
    %3096 = vst [vmem:[#allocation10 + $0x348] sm:$0xff] %v2978
    %3097 = vst [vmem:[#allocation10 + $0x350] sm:$0xff] %v2980
    %3098 = vst [vmem:[#allocation10 + $0x358] sm:$0xff] %v2982
    %3099 = vst [vmem:[#allocation10 + $0x360] sm:$0xff] %v2984
    %3100 = vst [vmem:[#allocation10 + $0x368] sm:$0xff] %v2986
    %3101 = vst [vmem:[#allocation10 + $0x370] sm:$0xff] %v2988
    %3102 = vst [vmem:[#allocation10 + $0x378] sm:$0xff] %v2990
    // Predicated region
    $region46: #{tpu_custom_call.1} parent=1 // pred_check
      _
    $region47: #{tpu_custom_call.1} parent=1 // pred_check_branch
      %3104 = sbr.rel (0) target = $region49
    $region48: #{tpu_custom_call.1} parent=1 // pred_region
      %s3106 = ssub.s32 14336, 14336
      %3107 = vsyncadd [#allocation4], %s3106
      %s3108 = sshll.u32 [#allocation10], 4
      %s3109 = int_to_ptr.vmem [resolvable:$true] %s3108
      %3114 = dma.vmem_to_hbm [thread:$0]  %s3109, 14336, %s7, [#allocation4], 896, 896, 56
    $region49: #{tpu_custom_call.1} parent=1 // pred_fallthru
      _
    // Predicated region
    $region50: #{tpu_custom_call.1} parent=1 // pred_check
      _
    $region51: #{tpu_custom_call.1} parent=1 // pred_check_branch
      %3116 = sbr.rel (0) target = $region53
    $region52: #{tpu_custom_call.1} parent=1 // pred_region
      %3117 = dma.done [#allocation4], 14336
    $region53: #{tpu_custom_call.1} parent=1 // pred_fallthru
      _
    %3118 = vsyncpa [#allocation3], 1
    %3119 = vsyncpa [#allocation6], 1
    %3120 = vsyncpa [#allocation9], 1
    %3121 = vsyncpa [#allocation4], 1

</llo_original>
